<compile_context>
chip_gen: v7x
topology: tpu7x:2x2x1
jax: 0.10.0
libtpu: 0.0.40
codegen_flags: <defaults>
</compile_context>

<pallas_src>
import jax
import jax.numpy as jnp
import numpy as np
from jax.experimental import pallas as pl
from jax.experimental.pallas import tpu as pltpu

BN_EPS = 1e-5  # PyTorch BatchNorm2d default


def _round_up(x, k):
    return (x + k - 1) // k * k


# ---------------------------------------------------------------------------
# Pass 1: for every (i, j) pair in the tile compute
#   h2 = centre_tap_conv2( maxpool2x2( relu( BN1_folded(A[i] + B[j]) ) ) )
# A/B columns are ordered (spatial s = 0..3 major, channel c = 0..hd-1 minor),
# so MaxPool2d(2,2) on the 2x2 map is a max over 4 lane groups of hd.
# ---------------------------------------------------------------------------
def _pair_kernel(a_ref, b_ref, w2_ref, o_ref):
    tn = a_ref.shape[0]
    hd = w2_ref.shape[0]
    b = b_ref[...]                                       # (tm, 4*hd)  f32
    w2 = w2_ref[...]                                     # (hd, hd)    bf16
    for a in range(tn):                                  # static unroll (tn == 8)
        # BN1-folded conv1 output for pairs (a, :) + ReLU
        h1 = jnp.maximum(b + a_ref[pl.ds(a, 1), :], 0.0)             # (tm, 4*hd)
        # MaxPool2d(2,2) on 2x2 spatial == max over the 4 lane groups of hd
        p = jnp.maximum(jnp.maximum(h1[:, 0:hd], h1[:, hd:2 * hd]),
                        jnp.maximum(h1[:, 2 * hd:3 * hd], h1[:, 3 * hd:4 * hd]))
        # conv2 (3x3 pad 1 on 1x1 spatial) == centre-tap matmul, bf16 MXU path
        h2 = jnp.dot(p.astype(jnp.bfloat16), w2,
                     preferred_element_type=jnp.float32)             # (tm, hd)
        o_ref[a] = h2.astype(o_ref.dtype)


def _pairwise_conv(a_fold, b_fold, w2c, tn, tm):
    n_pad, k4 = a_fold.shape
    m_pad = b_fold.shape[0]
    hd = w2c.shape[0]
    grid = (n_pad // tn, m_pad // tm)
    return pl.pallas_call(
        _pair_kernel,
        out_shape=jax.ShapeDtypeStruct((n_pad, m_pad, hd), jnp.bfloat16),
        grid_spec=pltpu.PrefetchScalarGridSpec(
            num_scalar_prefetch=0,
            grid=grid,
            in_specs=[
                pl.BlockSpec((tn, k4), lambda i, j: (i, 0)),
                pl.BlockSpec((tm, k4), lambda i, j: (j, 0)),
                pl.BlockSpec((hd, hd), lambda i, j: (0, 0)),
            ],
            out_specs=pl.BlockSpec((tn, tm, hd), lambda i, j: (i, j, 0)),
        ),
        compiler_params=pltpu.CompilerParams(
            dimension_semantics=("parallel", "parallel")),
    )(a_fold, b_fold, w2c)


# ---------------------------------------------------------------------------
# Pass 2: BN2 apply + ReLU + fc1 + ReLU + fc2 + sigmoid, tiled over pairs.
# ---------------------------------------------------------------------------
def _head_kernel(h2_ref, s2_ref, t2_ref, wf1_ref, bf1_ref, wf2_ref, bf2_ref,
                 o_ref):
    h = h2_ref[...].astype(jnp.float32) * s2_ref[...] + t2_ref[...]  # BN2 apply
    h = jnp.maximum(h, 0.0)                                          # ReLU
    f1 = jnp.dot(h, wf1_ref[...],
                 preferred_element_type=jnp.float32) + bf1_ref[...]  # fc1
    f1 = jnp.maximum(f1, 0.0)                                        # ReLU
    f2 = jnp.sum(f1 * wf2_ref[...], axis=1, keepdims=True) + bf2_ref[...]  # fc2
    o_ref[...] = jax.nn.sigmoid(f2)


def _head(h2_flat, scale2, shift2, wf1t, bf1, wf2, bf2, tr):
    rows, hd = h2_flat.shape
    grid = (rows // tr,)
    return pl.pallas_call(
        _head_kernel,
        out_shape=jax.ShapeDtypeStruct((rows, 1), jnp.float32),
        grid_spec=pltpu.PrefetchScalarGridSpec(
            num_scalar_prefetch=0,
            grid=grid,
            in_specs=[
                pl.BlockSpec((tr, hd), lambda i: (i, 0)),
                pl.BlockSpec((1, hd), lambda i: (0, 0)),
                pl.BlockSpec((1, hd), lambda i: (0, 0)),
                pl.BlockSpec(wf1t.shape, lambda i: (0, 0)),
                pl.BlockSpec(bf1.shape, lambda i: (0, 0)),
                pl.BlockSpec(wf2.shape, lambda i: (0, 0)),
                pl.BlockSpec(bf2.shape, lambda i: (0, 0)),
            ],
            out_specs=pl.BlockSpec((tr, 1), lambda i: (i, 0)),
        ),
        compiler_params=pltpu.CompilerParams(
            dimension_semantics=("parallel",)),
    )(h2_flat, scale2, shift2, wf1t, bf1, wf2, bf2)


# ---------------------------------------------------------------------------
# Wrapper
# ---------------------------------------------------------------------------
def relation_forward(x1, x2, params):
    w1, b1, g1, be1, w2, b2, g2, be2, wf1, bf1, wf2, bf2 = params
    n, m = x1.shape[0], x2.shape[0]
    C, H, W = x1.shape[1:]
    assert (H, W) == (2, 2), "fc1=Linear(64,8) implies 2x2 spatial input"
    hd = w1.shape[0]
    nm = n * m

    # --- factorized conv1 (O(n+m)): conv1(cat(x1[i],x2[j])) = A[i]+B[j]+b1 ---
    dn = ('NCHW', 'OIHW', 'NCHW')
    A = jax.lax.conv_general_dilated(x1, w1[:, :C], (1, 1), 'SAME',
                                     dimension_numbers=dn)           # (n,hd,2,2)
    B = jax.lax.conv_general_dilated(x2, w1[:, C:], (1, 1), 'SAME',
                                     dimension_numbers=dn)           # (m,hd,2,2)
    A = jnp.transpose(A, (0, 2, 3, 1)).reshape(n, H * W, hd)         # (n,4,hd)
    B = jnp.transpose(B, (0, 2, 3, 1)).reshape(m, H * W, hd)         # (m,4,hd)
    # conv biases b1 / b2 cancel exactly under BN's batch-mean subtraction.

    # --- exact training-mode BN1 batch statistics, analytically in O(n+m) ---
    muA = jnp.mean(A, axis=(0, 1))
    muB = jnp.mean(B, axis=(0, 1))
    Ac, Bc = A - muA, B - muB
    var1 = (jnp.mean(Ac * Ac, axis=(0, 1)) + jnp.mean(Bc * Bc, axis=(0, 1))
            + 2.0 * jnp.mean(jnp.mean(Ac, axis=0) * jnp.mean(Bc, axis=0), axis=0))
    rs1 = g1 * jax.lax.rsqrt(var1 + BN_EPS)
    a_fold = (A * rs1 + (be1 - (muA + muB) * rs1)).reshape(n, H * W * hd)
    b_fold = (B * rs1).reshape(m, H * W * hd)

    # --- pass 1 (Pallas): pairwise add + ReLU + maxpool + conv2, tiled grid ---
    tn = 8
    tm = min(128, _round_up(m, 16))
    n_pad, m_pad = _round_up(n, tn), _round_up(m, tm)
    a_fold = jnp.pad(a_fold, ((0, n_pad - n), (0, 0)))
    b_fold = jnp.pad(b_fold, ((0, m_pad - m), (0, 0)))
    w2c = jnp.transpose(w2[:, :, 1, 1]).astype(jnp.bfloat16)   # centre tap (cin,cout)
    h2_full = _pairwise_conv(a_fold, b_fold, w2c, tn, tm)      # (n_pad,m_pad,hd) bf16

    # --- exact BN2 batch statistics over the valid n*m pairs (tiny reduce) ---
    h2v = h2_full[:n, :m].reshape(nm, hd)                      # bf16
    h2f = h2v.astype(jnp.float32)
    mu2 = jnp.mean(h2f, axis=0)
    var2 = jnp.mean((h2f - mu2) ** 2, axis=0)
    rs2 = g2 * jax.lax.rsqrt(var2 + BN_EPS)
    scale2 = rs2[None, :]
    shift2 = (be2 - mu2 * rs2)[None, :]

    # --- pass 2 (Pallas): BN2 apply + ReLU + fc1 + ReLU + fc2 + sigmoid ---
    tr = min(512, _round_up(nm, 16))
    nm_pad = _round_up(nm, tr)
    h2p = jnp.pad(h2v, ((0, nm_pad - nm), (0, 0)))
    out = _head(h2p, scale2, shift2, wf1.T, bf1[None, :], wf2, bf2[None, :], tr)
    return out[:nm, 0].reshape(n, m)


# ---------------------------------------------------------------------------
# Pure-JAX reference mirroring the PyTorch forward (training-mode BN).
# ---------------------------------------------------------------------------
def relation_ref(x1, x2, params):
    w1, b1, g1, be1, w2, b2, g2, be2, wf1, bf1, wf2, bf2 = params
    n, m = x1.shape[0], x2.shape[0]
    C, H, W = x1.shape[1:]
    x1e = jnp.broadcast_to(x1[:, None], (n, m, C, H, W))
    x2e = jnp.broadcast_to(x2[None, :], (n, m, C, H, W))
    x = jnp.concatenate([x1e, x2e], axis=2).reshape(n * m, 2 * C, H, W)

    def conv_bn_relu(x, w, b, g, be):
        y = jax.lax.conv_general_dilated(
            x, w, window_strides=(1, 1), padding='SAME',
            dimension_numbers=('NCHW', 'OIHW', 'NCHW'))
        y = y + b[None, :, None, None]
        mu = jnp.mean(y, axis=(0, 2, 3), keepdims=True)
        var = jnp.mean((y - mu) ** 2, axis=(0, 2, 3), keepdims=True)
        y = (y - mu) * jax.lax.rsqrt(var + BN_EPS)
        y = y * g[None, :, None, None] + be[None, :, None, None]
        return jnp.maximum(y, 0.0)

    y = conv_bn_relu(x, w1, b1, g1, be1)
    y = jnp.max(y, axis=(2, 3), keepdims=True)       # MaxPool2d(2,2) on 2x2 spatial
    y = conv_bn_relu(y, w2, b2, g2, be2)
    y = y.reshape(y.shape[0], -1)
    y = jnp.maximum(y @ wf1.T + bf1, 0.0)
    y = y @ wf2.T + bf2
    return jax.nn.sigmoid(y).reshape(n, m)


if __name__ == "__main__":
    key = jax.random.PRNGKey(0)
    ks = jax.random.split(key, 12)

    # Relation defaults: in_dim = 2*256 -> per-input C=256, h_dim=z_dim=64, 2x2 spatial.
    n, m, C, H, W, hdim = 2, 4, 256, 2, 2, 64
    x1 = jax.random.normal(ks[0], (n, C, H, W), jnp.float32)
    x2 = jax.random.normal(ks[1], (m, C, H, W), jnp.float32)

    w1 = jax.random.normal(ks[2], (hdim, 2 * C, 3, 3), jnp.float32) * 0.02
    b1 = jax.random.normal(ks[3], (hdim,), jnp.float32) * 0.02
    g1 = jnp.ones((hdim,), jnp.float32)
    be1 = jnp.zeros((hdim,), jnp.float32)
    w2 = jax.random.normal(ks[4], (hdim, hdim, 3, 3), jnp.float32) * 0.05
    b2 = jax.random.normal(ks[5], (hdim,), jnp.float32) * 0.05
    g2 = jnp.ones((hdim,), jnp.float32)
    be2 = jnp.zeros((hdim,), jnp.float32)
    wf1 = jax.random.normal(ks[6], (8, hdim), jnp.float32) * 0.1
    bf1 = jax.random.normal(ks[7], (8,), jnp.float32) * 0.1
    wf2 = jax.random.normal(ks[8], (1, 8), jnp.float32) * 0.1
    bf2 = jax.random.normal(ks[9], (1,), jnp.float32) * 0.1
    params = (w1, b1, g1, be1, w2, b2, g2, be2, wf1, bf1, wf2, bf2)

    out = jax.jit(relation_forward)(x1, x2, params)
    out = jax.block_until_ready(out)

    ref = relation_ref(x1, x2, params)
    # bf16 conv2 / bf16 intermediate => loosened (but still tight) tolerances.
    np.testing.assert_allclose(np.asarray(out), np.asarray(ref),
                               rtol=1e-2, atol=5e-3)
    print("KERNEL_OK")
</pallas_src>

<mosaic_0001>
module attributes {stable_mosaic.version = 11 : i64} {
  func.func @_pair_kernel(%arg0: i32, %arg1: i32, %arg2: memref<8x256xf32, #tpu.memory_space<vmem>>, %arg3: memref<16x256xf32, #tpu.memory_space<vmem>>, %arg4: memref<64x64xbf16, #tpu.memory_space<vmem>>, %arg5: memref<8x16x64xbf16, #tpu.memory_space<vmem>>) attributes {dimension_semantics = [#tpu.dimension_semantics<parallel>, #tpu.dimension_semantics<parallel>], iteration_bounds = array<i64: 1, 1>, scalar_prefetch = 0 : i64, scratch_operands = 0 : i64, tpu.core_type = #tpu.core_type<tc>, window_params = [{transform_indices = @transform_0, window_bounds = array<i64: 8, 256>}, {transform_indices = @transform_1, window_bounds = array<i64: 16, 256>}, {pipeline_mode = #tpu.pipeline_mode<synchronous>, transform_indices = @transform_2, window_bounds = array<i64: 64, 64>}, {transform_indices = @transform_3, window_bounds = array<i64: 8, 16, 64>}]} {
    %c0 = arith.constant 0 : index
    %c0_0 = arith.constant 0 : index
    %0 = vector.load %arg3[%c0, %c0_0] : memref<16x256xf32, #tpu.memory_space<vmem>>, vector<16x256xf32>
    %c0_1 = arith.constant 0 : index
    %c0_2 = arith.constant 0 : index
    %1 = vector.load %arg4[%c0_1, %c0_2] : memref<64x64xbf16, #tpu.memory_space<vmem>>, vector<64x64xbf16>
    %c0_3 = arith.constant 0 : index
    %c0_4 = arith.constant 0 : index
    %2 = vector.load %arg2[%c0_3, %c0_4] : memref<8x256xf32, #tpu.memory_space<vmem>>, vector<1x256xf32>
    %3 = vector.broadcast %2 : vector<1x256xf32> to vector<16x256xf32>
    %4 = arith.addf %0, %3 : vector<16x256xf32>
    %cst = arith.constant 0.000000e+00 : f32
    %5 = vector.broadcast %cst : f32 to vector<16x256xf32>
    %6 = arith.maximumf %4, %5 : vector<16x256xf32>
    %7 = vector.extract_strided_slice %6 {offsets = [0, 0], sizes = [16, 64], strides = [1, 1]} : vector<16x256xf32> to vector<16x64xf32>
    %8 = vector.extract_strided_slice %6 {offsets = [0, 64], sizes = [16, 64], strides = [1, 1]} : vector<16x256xf32> to vector<16x64xf32>
    %9 = arith.maximumf %7, %8 : vector<16x64xf32>
    %10 = vector.extract_strided_slice %6 {offsets = [0, 128], sizes = [16, 64], strides = [1, 1]} : vector<16x256xf32> to vector<16x64xf32>
    %11 = vector.extract_strided_slice %6 {offsets = [0, 192], sizes = [16, 64], strides = [1, 1]} : vector<16x256xf32> to vector<16x64xf32>
    %12 = arith.maximumf %10, %11 : vector<16x64xf32>
    %13 = arith.maximumf %9, %12 : vector<16x64xf32>
    %14 = arith.truncf %13 : vector<16x64xf32> to vector<16x64xbf16>
    %cst_5 = arith.constant dense<0.000000e+00> : vector<16x64xf32>
    %15 = tpu.matmul %14, %1, %cst_5 {dimension_numbers = #tpu.dot_dimension_numbers<[1], [0], [0], [1], [0, 0, 1, 1], [], []>} : vector<16x64xbf16>, vector<64x64xbf16>, vector<16x64xf32> -> vector<16x64xf32>
    %16 = arith.truncf %15 : vector<16x64xf32> to vector<16x64xbf16>
    %c0_6 = arith.constant 0 : index
    %c0_7 = arith.constant 0 : index
    %c0_8 = arith.constant 0 : index
    %17 = vector.load %arg5[%c0_6, %c0_7, %c0_8] : memref<8x16x64xbf16, #tpu.memory_space<vmem>>, vector<1x16x64xbf16>
    %18 = vector.shape_cast %17 : vector<1x16x64xbf16> to vector<16x64xbf16>
    %19 = vector.shape_cast %16 : vector<16x64xbf16> to vector<1x16x64xbf16>
    tpu.vector_store %arg5[%c0_6, %c0_7, %c0_8], %19 {strides = array<i32>} : memref<8x16x64xbf16, #tpu.memory_space<vmem>>, vector<1x16x64xbf16>,
    %c1 = arith.constant 1 : index
    %c0_9 = arith.constant 0 : index
    %20 = vector.load %arg2[%c1, %c0_9] : memref<8x256xf32, #tpu.memory_space<vmem>>, vector<1x256xf32>
    %21 = vector.broadcast %20 : vector<1x256xf32> to vector<16x256xf32>
    %22 = arith.addf %0, %21 : vector<16x256xf32>
    %cst_10 = arith.constant 0.000000e+00 : f32
    %23 = vector.broadcast %cst_10 : f32 to vector<16x256xf32>
    %24 = arith.maximumf %22, %23 : vector<16x256xf32>
    %25 = vector.extract_strided_slice %24 {offsets = [0, 0], sizes = [16, 64], strides = [1, 1]} : vector<16x256xf32> to vector<16x64xf32>
    %26 = vector.extract_strided_slice %24 {offsets = [0, 64], sizes = [16, 64], strides = [1, 1]} : vector<16x256xf32> to vector<16x64xf32>
    %27 = arith.maximumf %25, %26 : vector<16x64xf32>
    %28 = vector.extract_strided_slice %24 {offsets = [0, 128], sizes = [16, 64], strides = [1, 1]} : vector<16x256xf32> to vector<16x64xf32>
    %29 = vector.extract_strided_slice %24 {offsets = [0, 192], sizes = [16, 64], strides = [1, 1]} : vector<16x256xf32> to vector<16x64xf32>
    %30 = arith.maximumf %28, %29 : vector<16x64xf32>
    %31 = arith.maximumf %27, %30 : vector<16x64xf32>
    %32 = arith.truncf %31 : vector<16x64xf32> to vector<16x64xbf16>
    %cst_11 = arith.constant dense<0.000000e+00> : vector<16x64xf32>
    %33 = tpu.matmul %32, %1, %cst_11 {dimension_numbers = #tpu.dot_dimension_numbers<[1], [0], [0], [1], [0, 0, 1, 1], [], []>} : vector<16x64xbf16>, vector<64x64xbf16>, vector<16x64xf32> -> vector<16x64xf32>
    %34 = arith.truncf %33 : vector<16x64xf32> to vector<16x64xbf16>
    %c1_12 = arith.constant 1 : index
    %c0_13 = arith.constant 0 : index
    %c0_14 = arith.constant 0 : index
    %35 = vector.load %arg5[%c1_12, %c0_13, %c0_14] : memref<8x16x64xbf16, #tpu.memory_space<vmem>>, vector<1x16x64xbf16>
    %36 = vector.shape_cast %35 : vector<1x16x64xbf16> to vector<16x64xbf16>
    %37 = vector.shape_cast %34 : vector<16x64xbf16> to vector<1x16x64xbf16>
    tpu.vector_store %arg5[%c1_12, %c0_13, %c0_14], %37 {strides = array<i32>} : memref<8x16x64xbf16, #tpu.memory_space<vmem>>, vector<1x16x64xbf16>,
    %c2 = arith.constant 2 : index
    %c0_15 = arith.constant 0 : index
    %38 = vector.load %arg2[%c2, %c0_15] : memref<8x256xf32, #tpu.memory_space<vmem>>, vector<1x256xf32>
    %39 = vector.broadcast %38 : vector<1x256xf32> to vector<16x256xf32>
    %40 = arith.addf %0, %39 : vector<16x256xf32>
    %cst_16 = arith.constant 0.000000e+00 : f32
    %41 = vector.broadcast %cst_16 : f32 to vector<16x256xf32>
    %42 = arith.maximumf %40, %41 : vector<16x256xf32>
    %43 = vector.extract_strided_slice %42 {offsets = [0, 0], sizes = [16, 64], strides = [1, 1]} : vector<16x256xf32> to vector<16x64xf32>
    %44 = vector.extract_strided_slice %42 {offsets = [0, 64], sizes = [16, 64], strides = [1, 1]} : vector<16x256xf32> to vector<16x64xf32>
    %45 = arith.maximumf %43, %44 : vector<16x64xf32>
    %46 = vector.extract_strided_slice %42 {offsets = [0, 128], sizes = [16, 64], strides = [1, 1]} : vector<16x256xf32> to vector<16x64xf32>
    %47 = vector.extract_strided_slice %42 {offsets = [0, 192], sizes = [16, 64], strides = [1, 1]} : vector<16x256xf32> to vector<16x64xf32>
    %48 = arith.maximumf %46, %47 : vector<16x64xf32>
    %49 = arith.maximumf %45, %48 : vector<16x64xf32>
    %50 = arith.truncf %49 : vector<16x64xf32> to vector<16x64xbf16>
    %cst_17 = arith.constant dense<0.000000e+00> : vector<16x64xf32>
    %51 = tpu.matmul %50, %1, %cst_17 {dimension_numbers = #tpu.dot_dimension_numbers<[1], [0], [0], [1], [0, 0, 1, 1], [], []>} : vector<16x64xbf16>, vector<64x64xbf16>, vector<16x64xf32> -> vector<16x64xf32>
    %52 = arith.truncf %51 : vector<16x64xf32> to vector<16x64xbf16>
    %c2_18 = arith.constant 2 : index
    %c0_19 = arith.constant 0 : index
    %c0_20 = arith.constant 0 : index
    %53 = vector.load %arg5[%c2_18, %c0_19, %c0_20] : memref<8x16x64xbf16, #tpu.memory_space<vmem>>, vector<1x16x64xbf16>
    %54 = vector.shape_cast %53 : vector<1x16x64xbf16> to vector<16x64xbf16>
    %55 = vector.shape_cast %52 : vector<16x64xbf16> to vector<1x16x64xbf16>
    tpu.vector_store %arg5[%c2_18, %c0_19, %c0_20], %55 {strides = array<i32>} : memref<8x16x64xbf16, #tpu.memory_space<vmem>>, vector<1x16x64xbf16>,
    %c3 = arith.constant 3 : index
    %c0_21 = arith.constant 0 : index
    %56 = vector.load %arg2[%c3, %c0_21] : memref<8x256xf32, #tpu.memory_space<vmem>>, vector<1x256xf32>
    %57 = vector.broadcast %56 : vector<1x256xf32> to vector<16x256xf32>
    %58 = arith.addf %0, %57 : vector<16x256xf32>
    %cst_22 = arith.constant 0.000000e+00 : f32
    %59 = vector.broadcast %cst_22 : f32 to vector<16x256xf32>
    %60 = arith.maximumf %58, %59 : vector<16x256xf32>
    %61 = vector.extract_strided_slice %60 {offsets = [0, 0], sizes = [16, 64], strides = [1, 1]} : vector<16x256xf32> to vector<16x64xf32>
    %62 = vector.extract_strided_slice %60 {offsets = [0, 64], sizes = [16, 64], strides = [1, 1]} : vector<16x256xf32> to vector<16x64xf32>
    %63 = arith.maximumf %61, %62 : vector<16x64xf32>
    %64 = vector.extract_strided_slice %60 {offsets = [0, 128], sizes = [16, 64], strides = [1, 1]} : vector<16x256xf32> to vector<16x64xf32>
    %65 = vector.extract_strided_slice %60 {offsets = [0, 192], sizes = [16, 64], strides = [1, 1]} : vector<16x256xf32> to vector<16x64xf32>
    %66 = arith.maximumf %64, %65 : vector<16x64xf32>
    %67 = arith.maximumf %63, %66 : vector<16x64xf32>
    %68 = arith.truncf %67 : vector<16x64xf32> to vector<16x64xbf16>
    %cst_23 = arith.constant dense<0.000000e+00> : vector<16x64xf32>
    %69 = tpu.matmul %68, %1, %cst_23 {dimension_numbers = #tpu.dot_dimension_numbers<[1], [0], [0], [1], [0, 0, 1, 1], [], []>} : vector<16x64xbf16>, vector<64x64xbf16>, vector<16x64xf32> -> vector<16x64xf32>
    %70 = arith.truncf %69 : vector<16x64xf32> to vector<16x64xbf16>
    %c3_24 = arith.constant 3 : index
    %c0_25 = arith.constant 0 : index
    %c0_26 = arith.constant 0 : index
    %71 = vector.load %arg5[%c3_24, %c0_25, %c0_26] : memref<8x16x64xbf16, #tpu.memory_space<vmem>>, vector<1x16x64xbf16>
    %72 = vector.shape_cast %71 : vector<1x16x64xbf16> to vector<16x64xbf16>
    %73 = vector.shape_cast %70 : vector<16x64xbf16> to vector<1x16x64xbf16>
    tpu.vector_store %arg5[%c3_24, %c0_25, %c0_26], %73 {strides = array<i32>} : memref<8x16x64xbf16, #tpu.memory_space<vmem>>, vector<1x16x64xbf16>,
    %c4 = arith.constant 4 : index
    %c0_27 = arith.constant 0 : index
    %74 = vector.load %arg2[%c4, %c0_27] : memref<8x256xf32, #tpu.memory_space<vmem>>, vector<1x256xf32>
    %75 = vector.broadcast %74 : vector<1x256xf32> to vector<16x256xf32>
    %76 = arith.addf %0, %75 : vector<16x256xf32>
    %cst_28 = arith.constant 0.000000e+00 : f32
    %77 = vector.broadcast %cst_28 : f32 to vector<16x256xf32>
    %78 = arith.maximumf %76, %77 : vector<16x256xf32>
    %79 = vector.extract_strided_slice %78 {offsets = [0, 0], sizes = [16, 64], strides = [1, 1]} : vector<16x256xf32> to vector<16x64xf32>
    %80 = vector.extract_strided_slice %78 {offsets = [0, 64], sizes = [16, 64], strides = [1, 1]} : vector<16x256xf32> to vector<16x64xf32>
    %81 = arith.maximumf %79, %80 : vector<16x64xf32>
    %82 = vector.extract_strided_slice %78 {offsets = [0, 128], sizes = [16, 64], strides = [1, 1]} : vector<16x256xf32> to vector<16x64xf32>
    %83 = vector.extract_strided_slice %78 {offsets = [0, 192], sizes = [16, 64], strides = [1, 1]} : vector<16x256xf32> to vector<16x64xf32>
    %84 = arith.maximumf %82, %83 : vector<16x64xf32>
    %85 = arith.maximumf %81, %84 : vector<16x64xf32>
    %86 = arith.truncf %85 : vector<16x64xf32> to vector<16x64xbf16>
    %cst_29 = arith.constant dense<0.000000e+00> : vector<16x64xf32>
    %87 = tpu.matmul %86, %1, %cst_29 {dimension_numbers = #tpu.dot_dimension_numbers<[1], [0], [0], [1], [0, 0, 1, 1], [], []>} : vector<16x64xbf16>, vector<64x64xbf16>, vector<16x64xf32> -> vector<16x64xf32>
    %88 = arith.truncf %87 : vector<16x64xf32> to vector<16x64xbf16>
    %c4_30 = arith.constant 4 : index
    %c0_31 = arith.constant 0 : index
    %c0_32 = arith.constant 0 : index
    %89 = vector.load %arg5[%c4_30, %c0_31, %c0_32] : memref<8x16x64xbf16, #tpu.memory_space<vmem>>, vector<1x16x64xbf16>
    %90 = vector.shape_cast %89 : vector<1x16x64xbf16> to vector<16x64xbf16>
    %91 = vector.shape_cast %88 : vector<16x64xbf16> to vector<1x16x64xbf16>
    tpu.vector_store %arg5[%c4_30, %c0_31, %c0_32], %91 {strides = array<i32>} : memref<8x16x64xbf16, #tpu.memory_space<vmem>>, vector<1x16x64xbf16>,
    %c5 = arith.constant 5 : index
    %c0_33 = arith.constant 0 : index
    %92 = vector.load %arg2[%c5, %c0_33] : memref<8x256xf32, #tpu.memory_space<vmem>>, vector<1x256xf32>
    %93 = vector.broadcast %92 : vector<1x256xf32> to vector<16x256xf32>
    %94 = arith.addf %0, %93 : vector<16x256xf32>
    %cst_34 = arith.constant 0.000000e+00 : f32
    %95 = vector.broadcast %cst_34 : f32 to vector<16x256xf32>
    %96 = arith.maximumf %94, %95 : vector<16x256xf32>
    %97 = vector.extract_strided_slice %96 {offsets = [0, 0], sizes = [16, 64], strides = [1, 1]} : vector<16x256xf32> to vector<16x64xf32>
    %98 = vector.extract_strided_slice %96 {offsets = [0, 64], sizes = [16, 64], strides = [1, 1]} : vector<16x256xf32> to vector<16x64xf32>
    %99 = arith.maximumf %97, %98 : vector<16x64xf32>
    %100 = vector.extract_strided_slice %96 {offsets = [0, 128], sizes = [16, 64], strides = [1, 1]} : vector<16x256xf32> to vector<16x64xf32>
    %101 = vector.extract_strided_slice %96 {offsets = [0, 192], sizes = [16, 64], strides = [1, 1]} : vector<16x256xf32> to vector<16x64xf32>
    %102 = arith.maximumf %100, %101 : vector<16x64xf32>
    %103 = arith.maximumf %99, %102 : vector<16x64xf32>
    %104 = arith.truncf %103 : vector<16x64xf32> to vector<16x64xbf16>
    %cst_35 = arith.constant dense<0.000000e+00> : vector<16x64xf32>
    %105 = tpu.matmul %104, %1, %cst_35 {dimension_numbers = #tpu.dot_dimension_numbers<[1], [0], [0], [1], [0, 0, 1, 1], [], []>} : vector<16x64xbf16>, vector<64x64xbf16>, vector<16x64xf32> -> vector<16x64xf32>
    %106 = arith.truncf %105 : vector<16x64xf32> to vector<16x64xbf16>
    %c5_36 = arith.constant 5 : index
    %c0_37 = arith.constant 0 : index
    %c0_38 = arith.constant 0 : index
    %107 = vector.load %arg5[%c5_36, %c0_37, %c0_38] : memref<8x16x64xbf16, #tpu.memory_space<vmem>>, vector<1x16x64xbf16>
    %108 = vector.shape_cast %107 : vector<1x16x64xbf16> to vector<16x64xbf16>
    %109 = vector.shape_cast %106 : vector<16x64xbf16> to vector<1x16x64xbf16>
    tpu.vector_store %arg5[%c5_36, %c0_37, %c0_38], %109 {strides = array<i32>} : memref<8x16x64xbf16, #tpu.memory_space<vmem>>, vector<1x16x64xbf16>,
    %c6 = arith.constant 6 : index
    %c0_39 = arith.constant 0 : index
    %110 = vector.load %arg2[%c6, %c0_39] : memref<8x256xf32, #tpu.memory_space<vmem>>, vector<1x256xf32>
    %111 = vector.broadcast %110 : vector<1x256xf32> to vector<16x256xf32>
    %112 = arith.addf %0, %111 : vector<16x256xf32>
    %cst_40 = arith.constant 0.000000e+00 : f32
    %113 = vector.broadcast %cst_40 : f32 to vector<16x256xf32>
    %114 = arith.maximumf %112, %113 : vector<16x256xf32>
    %115 = vector.extract_strided_slice %114 {offsets = [0, 0], sizes = [16, 64], strides = [1, 1]} : vector<16x256xf32> to vector<16x64xf32>
    %116 = vector.extract_strided_slice %114 {offsets = [0, 64], sizes = [16, 64], strides = [1, 1]} : vector<16x256xf32> to vector<16x64xf32>
    %117 = arith.maximumf %115, %116 : vector<16x64xf32>
    %118 = vector.extract_strided_slice %114 {offsets = [0, 128], sizes = [16, 64], strides = [1, 1]} : vector<16x256xf32> to vector<16x64xf32>
    %119 = vector.extract_strided_slice %114 {offsets = [0, 192], sizes = [16, 64], strides = [1, 1]} : vector<16x256xf32> to vector<16x64xf32>
    %120 = arith.maximumf %118, %119 : vector<16x64xf32>
    %121 = arith.maximumf %117, %120 : vector<16x64xf32>
    %122 = arith.truncf %121 : vector<16x64xf32> to vector<16x64xbf16>
    %cst_41 = arith.constant dense<0.000000e+00> : vector<16x64xf32>
    %123 = tpu.matmul %122, %1, %cst_41 {dimension_numbers = #tpu.dot_dimension_numbers<[1], [0], [0], [1], [0, 0, 1, 1], [], []>} : vector<16x64xbf16>, vector<64x64xbf16>, vector<16x64xf32> -> vector<16x64xf32>
    %124 = arith.truncf %123 : vector<16x64xf32> to vector<16x64xbf16>
    %c6_42 = arith.constant 6 : index
    %c0_43 = arith.constant 0 : index
    %c0_44 = arith.constant 0 : index
    %125 = vector.load %arg5[%c6_42, %c0_43, %c0_44] : memref<8x16x64xbf16, #tpu.memory_space<vmem>>, vector<1x16x64xbf16>
    %126 = vector.shape_cast %125 : vector<1x16x64xbf16> to vector<16x64xbf16>
    %127 = vector.shape_cast %124 : vector<16x64xbf16> to vector<1x16x64xbf16>
    tpu.vector_store %arg5[%c6_42, %c0_43, %c0_44], %127 {strides = array<i32>} : memref<8x16x64xbf16, #tpu.memory_space<vmem>>, vector<1x16x64xbf16>,
    %c7 = arith.constant 7 : index
    %c0_45 = arith.constant 0 : index
    %128 = vector.load %arg2[%c7, %c0_45] : memref<8x256xf32, #tpu.memory_space<vmem>>, vector<1x256xf32>
    %129 = vector.broadcast %128 : vector<1x256xf32> to vector<16x256xf32>
    %130 = arith.addf %0, %129 : vector<16x256xf32>
    %cst_46 = arith.constant 0.000000e+00 : f32
    %131 = vector.broadcast %cst_46 : f32 to vector<16x256xf32>
    %132 = arith.maximumf %130, %131 : vector<16x256xf32>
    %133 = vector.extract_strided_slice %132 {offsets = [0, 0], sizes = [16, 64], strides = [1, 1]} : vector<16x256xf32> to vector<16x64xf32>
    %134 = vector.extract_strided_slice %132 {offsets = [0, 64], sizes = [16, 64], strides = [1, 1]} : vector<16x256xf32> to vector<16x64xf32>
    %135 = arith.maximumf %133, %134 : vector<16x64xf32>
    %136 = vector.extract_strided_slice %132 {offsets = [0, 128], sizes = [16, 64], strides = [1, 1]} : vector<16x256xf32> to vector<16x64xf32>
    %137 = vector.extract_strided_slice %132 {offsets = [0, 192], sizes = [16, 64], strides = [1, 1]} : vector<16x256xf32> to vector<16x64xf32>
    %138 = arith.maximumf %136, %137 : vector<16x64xf32>
    %139 = arith.maximumf %135, %138 : vector<16x64xf32>
    %140 = arith.truncf %139 : vector<16x64xf32> to vector<16x64xbf16>
    %cst_47 = arith.constant dense<0.000000e+00> : vector<16x64xf32>
    %141 = tpu.matmul %140, %1, %cst_47 {dimension_numbers = #tpu.dot_dimension_numbers<[1], [0], [0], [1], [0, 0, 1, 1], [], []>} : vector<16x64xbf16>, vector<64x64xbf16>, vector<16x64xf32> -> vector<16x64xf32>
    %142 = arith.truncf %141 : vector<16x64xf32> to vector<16x64xbf16>
    %c7_48 = arith.constant 7 : index
    %c0_49 = arith.constant 0 : index
    %c0_50 = arith.constant 0 : index
    %143 = vector.load %arg5[%c7_48, %c0_49, %c0_50] : memref<8x16x64xbf16, #tpu.memory_space<vmem>>, vector<1x16x64xbf16>
    %144 = vector.shape_cast %143 : vector<1x16x64xbf16> to vector<16x64xbf16>
    %145 = vector.shape_cast %142 : vector<16x64xbf16> to vector<1x16x64xbf16>
    tpu.vector_store %arg5[%c7_48, %c0_49, %c0_50], %145 {strides = array<i32>} : memref<8x16x64xbf16, #tpu.memory_space<vmem>>, vector<1x16x64xbf16>,
    return
  }
  func.func @transform_0(%arg0: i32, %arg1: i32) -> (i32, i32) {
    %c0_i32 = arith.constant 0 : i32
    %c0_i32_0 = arith.constant 0 : i32
    return %arg0, %c0_i32 : i32, i32
  }
  func.func @transform_1(%arg0: i32, %arg1: i32) -> (i32, i32) {
    %c0_i32 = arith.constant 0 : i32
    %c0_i32_0 = arith.constant 0 : i32
    return %arg1, %c0_i32 : i32, i32
  }
  func.func @transform_2(%arg0: i32, %arg1: i32) -> (i32, i32) {
    %c0_i32 = arith.constant 0 : i32
    %c0_i32_0 = arith.constant 0 : i32
    %c0_i32_1 = arith.constant 0 : i32
    return %c0_i32, %c0_i32_0 : i32, i32
  }
  func.func @transform_3(%arg0: i32, %arg1: i32) -> (i32, i32, i32) {
    %c0_i32 = arith.constant 0 : i32
    %c0_i32_0 = arith.constant 0 : i32
    return %arg0, %arg1, %c0_i32 : i32, i32, i32
  }
}

module attributes {stable_mosaic.version = 11 : i64} {
  func.func @_head_kernel(%arg0: i32, %arg1: memref<16x64xbf16, #tpu.memory_space<vmem>>, %arg2: memref<1x64xf32, #tpu.memory_space<vmem>>, %arg3: memref<1x64xf32, #tpu.memory_space<vmem>>, %arg4: memref<64x8xf32, #tpu.memory_space<vmem>>, %arg5: memref<1x8xf32, #tpu.memory_space<vmem>>, %arg6: memref<1x8xf32, #tpu.memory_space<vmem>>, %arg7: memref<1x1xf32, #tpu.memory_space<vmem>>, %arg8: memref<16x1xf32, #tpu.memory_space<vmem>>) attributes {dimension_semantics = [#tpu.dimension_semantics<parallel>], iteration_bounds = array<i64: 1>, scalar_prefetch = 0 : i64, scratch_operands = 0 : i64, tpu.core_type = #tpu.core_type<tc>, window_params = [{transform_indices = @transform_0, window_bounds = array<i64: 16, 64>}, {pipeline_mode = #tpu.pipeline_mode<synchronous>, transform_indices = @transform_1, window_bounds = array<i64: 1, 64>}, {pipeline_mode = #tpu.pipeline_mode<synchronous>, transform_indices = @transform_2, window_bounds = array<i64: 1, 64>}, {pipeline_mode = #tpu.pipeline_mode<synchronous>, transform_indices = @transform_3, window_bounds = array<i64: 64, 8>}, {pipeline_mode = #tpu.pipeline_mode<synchronous>, transform_indices = @transform_4, window_bounds = array<i64: 1, 8>}, {pipeline_mode = #tpu.pipeline_mode<synchronous>, transform_indices = @transform_5, window_bounds = array<i64: 1, 8>}, {pipeline_mode = #tpu.pipeline_mode<synchronous>, transform_indices = @transform_6, window_bounds = array<i64: 1, 1>}, {transform_indices = @transform_7, window_bounds = array<i64: 16, 1>}]} {
    %c0 = arith.constant 0 : index
    %c0_0 = arith.constant 0 : index
    %0 = vector.load %arg1[%c0, %c0_0] : memref<16x64xbf16, #tpu.memory_space<vmem>>, vector<16x64xbf16>
    %1 = arith.extf %0 : vector<16x64xbf16> to vector<16x64xf32>
    %c0_1 = arith.constant 0 : index
    %c0_2 = arith.constant 0 : index
    %2 = vector.load %arg2[%c0_1, %c0_2] : memref<1x64xf32, #tpu.memory_space<vmem>>, vector<1x64xf32>
    %3 = vector.broadcast %2 : vector<1x64xf32> to vector<16x64xf32>
    %4 = arith.mulf %1, %3 : vector<16x64xf32>
    %c0_3 = arith.constant 0 : index
    %c0_4 = arith.constant 0 : index
    %5 = vector.load %arg3[%c0_3, %c0_4] : memref<1x64xf32, #tpu.memory_space<vmem>>, vector<1x64xf32>
    %6 = vector.broadcast %5 : vector<1x64xf32> to vector<16x64xf32>
    %7 = arith.addf %4, %6 : vector<16x64xf32>
    %cst = arith.constant 0.000000e+00 : f32
    %8 = vector.broadcast %cst : f32 to vector<16x64xf32>
    %9 = arith.maximumf %7, %8 : vector<16x64xf32>
    %c0_5 = arith.constant 0 : index
    %c0_6 = arith.constant 0 : index
    %10 = vector.load %arg4[%c0_5, %c0_6] : memref<64x8xf32, #tpu.memory_space<vmem>>, vector<64x8xf32>
    %cst_7 = arith.constant dense<0.000000e+00> : vector<16x8xf32>
    %11 = tpu.matmul %9, %10, %cst_7 {dimension_numbers = #tpu.dot_dimension_numbers<[1], [0], [0], [1], [0, 0, 1, 1], [], []>} : vector<16x64xf32>, vector<64x8xf32>, vector<16x8xf32> -> vector<16x8xf32>
    %c0_8 = arith.constant 0 : index
    %c0_9 = arith.constant 0 : index
    %12 = vector.load %arg5[%c0_8, %c0_9] : memref<1x8xf32, #tpu.memory_space<vmem>>, vector<1x8xf32>
    %13 = vector.broadcast %12 : vector<1x8xf32> to vector<16x8xf32>
    %14 = arith.addf %11, %13 : vector<16x8xf32>
    %cst_10 = arith.constant 0.000000e+00 : f32
    %15 = vector.broadcast %cst_10 : f32 to vector<16x8xf32>
    %16 = arith.maximumf %14, %15 : vector<16x8xf32>
    %c0_11 = arith.constant 0 : index
    %c0_12 = arith.constant 0 : index
    %17 = vector.load %arg6[%c0_11, %c0_12] : memref<1x8xf32, #tpu.memory_space<vmem>>, vector<1x8xf32>
    %18 = vector.broadcast %17 : vector<1x8xf32> to vector<16x8xf32>
    %19 = arith.mulf %16, %18 : vector<16x8xf32>
    %cst_13 = arith.constant dense<0.000000e+00> : vector<16xf32>
    %20 = vector.multi_reduction <add>, %19, %cst_13 [1] : vector<16x8xf32> to vector<16xf32>
    %21 = vector.shape_cast %20 : vector<16xf32> to vector<16x1xf32>
    %c0_14 = arith.constant 0 : index
    %c0_15 = arith.constant 0 : index
    %22 = vector.load %arg7[%c0_14, %c0_15] : memref<1x1xf32, #tpu.memory_space<vmem>>, vector<1x1xf32>
    %23 = vector.broadcast %22 : vector<1x1xf32> to vector<16x1xf32>
    %24 = arith.addf %21, %23 : vector<16x1xf32>
    %25 = arith.negf %24 : vector<16x1xf32>
    %26 = math.exp %25 : vector<16x1xf32>
    %cst_16 = arith.constant 1.000000e+00 : f32
    %27 = vector.broadcast %cst_16 : f32 to vector<16x1xf32>
    %28 = arith.addf %27, %26 : vector<16x1xf32>
    %29 = arith.divf %27, %28 : vector<16x1xf32>
    %c0_17 = arith.constant 0 : index
    %c0_18 = arith.constant 0 : index
    %30 = vector.load %arg8[%c0_17, %c0_18] : memref<16x1xf32, #tpu.memory_space<vmem>>, vector<16x1xf32>
    tpu.vector_store %arg8[%c0_17, %c0_18], %29 {strides = array<i32>} : memref<16x1xf32, #tpu.memory_space<vmem>>, vector<16x1xf32>,
    return
  }
  func.func @transform_0(%arg0: i32) -> (i32, i32) {
    %c0_i32 = arith.constant 0 : i32
    %c0_i32_0 = arith.constant 0 : i32
    return %arg0, %c0_i32 : i32, i32
  }
  func.func @transform_1(%arg0: i32) -> (i32, i32) {
    %c0_i32 = arith.constant 0 : i32
    %c0_i32_0 = arith.constant 0 : i32
    %c0_i32_1 = arith.constant 0 : i32
    return %c0_i32, %c0_i32_0 : i32, i32
  }
  func.func @transform_2(%arg0: i32) -> (i32, i32) {
    %c0_i32 = arith.constant 0 : i32
    %c0_i32_0 = arith.constant 0 : i32
    %c0_i32_1 = arith.constant 0 : i32
    return %c0_i32, %c0_i32_0 : i32, i32
  }
  func.func @transform_3(%arg0: i32) -> (i32, i32) {
    %c0_i32 = arith.constant 0 : i32
    %c0_i32_0 = arith.constant 0 : i32
    %c0_i32_1 = arith.constant 0 : i32
    return %c0_i32, %c0_i32_0 : i32, i32
  }
  func.func @transform_4(%arg0: i32) -> (i32, i32) {
    %c0_i32 = arith.constant 0 : i32
    %c0_i32_0 = arith.constant 0 : i32
    %c0_i32_1 = arith.constant 0 : i32
    return %c0_i32, %c0_i32_0 : i32, i32
  }
  func.func @transform_5(%arg0: i32) -> (i32, i32) {
    %c0_i32 = arith.constant 0 : i32
    %c0_i32_0 = arith.constant 0 : i32
    %c0_i32_1 = arith.constant 0 : i32
    return %c0_i32, %c0_i32_0 : i32, i32
  }
  func.func @transform_6(%arg0: i32) -> (i32, i32) {
    %c0_i32 = arith.constant 0 : i32
    %c0_i32_0 = arith.constant 0 : i32
    %c0_i32_1 = arith.constant 0 : i32
    return %c0_i32, %c0_i32_0 : i32, i32
  }
  func.func @transform_7(%arg0: i32) -> (i32, i32) {
    %c0_i32 = arith.constant 0 : i32
    %c0_i32_0 = arith.constant 0 : i32
    return %arg0, %c0_i32 : i32, i32
  }
}

</mosaic_0001>

<llo_original>
// kernel: reverse
$region0: #{reverse}
  #allocation0 [shape = 's32[1]{0}', space=sflag, size = 0x4, scoped, tag = 'scoped memory for reverse']
  %s0 = inlined_call_operand.vmem [shape: bf16[64,256,3,3], index: 0, kind: input, shape index: {}]
  %s1 = inlined_call_operand.vmem [shape: bf16[64,256,3,3], index: 1, kind: output, shape index: {}]
  %s2 = scalar_lea.vmem %s0, 512
  %v3 = vld [vmem:[%s2] sm:$0xf]
  %v4 = vunpack.c.l.bf16 %v3
  %v5 = vunpack.c.h.bf16 %v3
  %s6 = scalar_lea.vmem %s0, 320
  %v7 = vld [vmem:[%s6] sm:$0xf]
  %v8 = vunpack.c.l.bf16 %v7
  %v9 = vunpack.c.h.bf16 %v7
  %s10 = scalar_lea.vmem %s1, 192
  %s11 = scalar_lea.vmem %s0, 128
  %v12 = vld [vmem:[%s11] sm:$0xf]
  %v13 = vunpack.c.l.bf16 %v12
  %v14 = vunpack.c.h.bf16 %v12
  %s15 = scalar_lea.vmem %s1, 384
  %s16 = scalar_lea.vmem %s0, 448
  %v17 = vld [vmem:[%s16] sm:$0xf]
  %v18 = vunpack.c.l.bf16 %v17
  %v19 = vunpack.c.h.bf16 %v17
  %s20 = scalar_lea.vmem %s1, 64
  %s21 = scalar_lea.vmem %s0, 256
  %v22 = vld [vmem:[%s21] sm:$0xf]
  %v23 = vunpack.c.l.bf16 %v22
  %v24 = vunpack.c.h.bf16 %v22
  %s25 = scalar_lea.vmem %s1, 256
  %s26 = scalar_lea.vmem %s0, 64
  %v27 = vld [vmem:[%s26] sm:$0xf]
  %v28 = vunpack.c.l.bf16 %v27
  %v29 = vunpack.c.h.bf16 %v27
  %s30 = scalar_lea.vmem %s1, 448
  %s31 = scalar_lea.vmem %s0, 384
  %v32 = vld [vmem:[%s31] sm:$0xf]
  %v33 = vunpack.c.l.bf16 %v32
  %v34 = vunpack.c.h.bf16 %v32
  %s35 = scalar_lea.vmem %s1, 128
  %s36 = scalar_lea.vmem %s0, 192
  %v37 = vld [vmem:[%s36] sm:$0xf]
  %v38 = vunpack.c.l.bf16 %v37
  %v39 = vunpack.c.h.bf16 %v37
  %s40 = scalar_lea.vmem %s1, 320
  %v41 = vld [vmem:[%s0] sm:$0xf]
  %v42 = vunpack.c.l.bf16 %v41
  %v43 = vunpack.c.h.bf16 %v41
  %s44 = scalar_lea.vmem %s1, 512
  %s45 = scalar_lea.vmem %s0, 520
  %v46 = vld [vmem:[%s45] sm:$0xf]
  %v47 = vunpack.c.l.bf16 %v46
  %v48 = vunpack.c.h.bf16 %v46
  %s49 = scalar_lea.vmem %s1, 8
  %s50 = scalar_lea.vmem %s0, 328
  %v51 = vld [vmem:[%s50] sm:$0xf]
  %v52 = vunpack.c.l.bf16 %v51
  %v53 = vunpack.c.h.bf16 %v51
  %s54 = scalar_lea.vmem %s1, 200
  %s55 = scalar_lea.vmem %s0, 136
  %v56 = vld [vmem:[%s55] sm:$0xf]
  %v57 = vunpack.c.l.bf16 %v56
  %v58 = vunpack.c.h.bf16 %v56
  %s59 = scalar_lea.vmem %s1, 392
  %s60 = scalar_lea.vmem %s0, 456
  %v61 = vld [vmem:[%s60] sm:$0xf]
  %v62 = vunpack.c.l.bf16 %v61
  %v63 = vunpack.c.h.bf16 %v61
  %s64 = scalar_lea.vmem %s1, 72
  %s65 = scalar_lea.vmem %s0, 264
  %v66 = vld [vmem:[%s65] sm:$0xf]
  %v67 = vunpack.c.l.bf16 %v66
  %v68 = vunpack.c.h.bf16 %v66
  %s69 = scalar_lea.vmem %s1, 264
  %s70 = scalar_lea.vmem %s0, 72
  %v71 = vld [vmem:[%s70] sm:$0xf]
  %v72 = vunpack.c.l.bf16 %v71
  %v73 = vunpack.c.h.bf16 %v71
  %s74 = scalar_lea.vmem %s1, 456
  %s75 = scalar_lea.vmem %s0, 392
  %v76 = vld [vmem:[%s75] sm:$0xf]
  %v77 = vunpack.c.l.bf16 %v76
  %v78 = vunpack.c.h.bf16 %v76
  %s79 = scalar_lea.vmem %s1, 136
  %s80 = scalar_lea.vmem %s0, 200
  %v81 = vld [vmem:[%s80] sm:$0xf]
  %v82 = vunpack.c.l.bf16 %v81
  %v83 = vunpack.c.h.bf16 %v81
  %s84 = scalar_lea.vmem %s1, 328
  %s85 = scalar_lea.vmem %s0, 8
  %v86 = vld [vmem:[%s85] sm:$0xf]
  %v87 = vunpack.c.l.bf16 %v86
  %v88 = vunpack.c.h.bf16 %v86
  %s89 = scalar_lea.vmem %s1, 520
  %s90 = scalar_lea.vmem %s0, 528
  %v91 = vld [vmem:[%s90] sm:$0xf]
  %v92 = vunpack.c.l.bf16 %v91
  %v93 = vunpack.c.h.bf16 %v91
  %s94 = scalar_lea.vmem %s1, 16
  %s95 = scalar_lea.vmem %s0, 336
  %v96 = vld [vmem:[%s95] sm:$0xf]
  %v97 = vunpack.c.l.bf16 %v96
  %v98 = vunpack.c.h.bf16 %v96
  %s99 = scalar_lea.vmem %s1, 208
  %s100 = scalar_lea.vmem %s0, 144
  %v101 = vld [vmem:[%s100] sm:$0xf]
  %v102 = vunpack.c.l.bf16 %v101
  %v103 = vunpack.c.h.bf16 %v101
  %s104 = scalar_lea.vmem %s1, 400
  %s105 = scalar_lea.vmem %s0, 464
  %v106 = vld [vmem:[%s105] sm:$0xf]
  %v107 = vunpack.c.l.bf16 %v106
  %v108 = vunpack.c.h.bf16 %v106
  %s109 = scalar_lea.vmem %s1, 80
  %s110 = scalar_lea.vmem %s0, 272
  %v111 = vld [vmem:[%s110] sm:$0xf]
  %v112 = vunpack.c.l.bf16 %v111
  %v113 = vunpack.c.h.bf16 %v111
  %s114 = scalar_lea.vmem %s1, 272
  %s115 = scalar_lea.vmem %s0, 80
  %v116 = vld [vmem:[%s115] sm:$0xf]
  %v117 = vunpack.c.l.bf16 %v116
  %v118 = vunpack.c.h.bf16 %v116
  %s119 = scalar_lea.vmem %s1, 464
  %s120 = scalar_lea.vmem %s0, 400
  %v121 = vld [vmem:[%s120] sm:$0xf]
  %v122 = vunpack.c.l.bf16 %v121
  %v123 = vunpack.c.h.bf16 %v121
  %s124 = scalar_lea.vmem %s1, 144
  %s125 = scalar_lea.vmem %s0, 208
  %v126 = vld [vmem:[%s125] sm:$0xf]
  %v127 = vunpack.c.l.bf16 %v126
  %v128 = vunpack.c.h.bf16 %v126
  %s129 = scalar_lea.vmem %s1, 336
  %s130 = scalar_lea.vmem %s0, 16
  %v131 = vld [vmem:[%s130] sm:$0xf]
  %v132 = vunpack.c.l.bf16 %v131
  %v133 = vunpack.c.h.bf16 %v131
  %s134 = scalar_lea.vmem %s1, 528
  %s135 = scalar_lea.vmem %s0, 536
  %v136 = vld [vmem:[%s135] sm:$0xf]
  %v137 = vunpack.c.l.bf16 %v136
  %v138 = vunpack.c.h.bf16 %v136
  %s139 = scalar_lea.vmem %s1, 24
  %s140 = scalar_lea.vmem %s0, 344
  %v141 = vld [vmem:[%s140] sm:$0xf]
  %v142 = vunpack.c.l.bf16 %v141
  %v143 = vunpack.c.h.bf16 %v141
  %s144 = scalar_lea.vmem %s1, 216
  %s145 = scalar_lea.vmem %s0, 152
  %v146 = vld [vmem:[%s145] sm:$0xf]
  %v147 = vunpack.c.l.bf16 %v146
  %v148 = vunpack.c.h.bf16 %v146
  %s149 = scalar_lea.vmem %s1, 408
  %s150 = scalar_lea.vmem %s0, 472
  %v151 = vld [vmem:[%s150] sm:$0xf]
  %v152 = vunpack.c.l.bf16 %v151
  %v153 = vunpack.c.h.bf16 %v151
  %s154 = scalar_lea.vmem %s1, 88
  %s155 = scalar_lea.vmem %s0, 280
  %v156 = vld [vmem:[%s155] sm:$0xf]
  %v157 = vunpack.c.l.bf16 %v156
  %v158 = vunpack.c.h.bf16 %v156
  %s159 = scalar_lea.vmem %s1, 280
  %s160 = scalar_lea.vmem %s0, 88
  %v161 = vld [vmem:[%s160] sm:$0xf]
  %v162 = vunpack.c.l.bf16 %v161
  %v163 = vunpack.c.h.bf16 %v161
  %s164 = scalar_lea.vmem %s1, 472
  %s165 = scalar_lea.vmem %s0, 408
  %v166 = vld [vmem:[%s165] sm:$0xf]
  %v167 = vunpack.c.l.bf16 %v166
  %v168 = vunpack.c.h.bf16 %v166
  %s169 = scalar_lea.vmem %s1, 152
  %s170 = scalar_lea.vmem %s0, 216
  %v171 = vld [vmem:[%s170] sm:$0xf]
  %v172 = vunpack.c.l.bf16 %v171
  %v173 = vunpack.c.h.bf16 %v171
  %s174 = scalar_lea.vmem %s1, 344
  %s175 = scalar_lea.vmem %s0, 24
  %v176 = vld [vmem:[%s175] sm:$0xf]
  %v177 = vunpack.c.l.bf16 %v176
  %v178 = vunpack.c.h.bf16 %v176
  %s179 = scalar_lea.vmem %s1, 536
  %s180 = scalar_lea.vmem %s0, 544
  %v181 = vld [vmem:[%s180] sm:$0xf]
  %v182 = vunpack.c.l.bf16 %v181
  %v183 = vunpack.c.h.bf16 %v181
  %s184 = scalar_lea.vmem %s1, 32
  %s185 = scalar_lea.vmem %s0, 352
  %v186 = vld [vmem:[%s185] sm:$0xf]
  %v187 = vunpack.c.l.bf16 %v186
  %v188 = vunpack.c.h.bf16 %v186
  %s189 = scalar_lea.vmem %s1, 224
  %s190 = scalar_lea.vmem %s0, 160
  %v191 = vld [vmem:[%s190] sm:$0xf]
  %v192 = vunpack.c.l.bf16 %v191
  %v193 = vunpack.c.h.bf16 %v191
  %s194 = scalar_lea.vmem %s1, 416
  %s195 = scalar_lea.vmem %s0, 480
  %v196 = vld [vmem:[%s195] sm:$0xf]
  %v197 = vunpack.c.l.bf16 %v196
  %v198 = vunpack.c.h.bf16 %v196
  %s199 = scalar_lea.vmem %s1, 96
  %s200 = scalar_lea.vmem %s0, 288
  %v201 = vld [vmem:[%s200] sm:$0xf]
  %v202 = vunpack.c.l.bf16 %v201
  %v203 = vunpack.c.h.bf16 %v201
  %s204 = scalar_lea.vmem %s1, 288
  %s205 = scalar_lea.vmem %s0, 96
  %v206 = vld [vmem:[%s205] sm:$0xf]
  %v207 = vunpack.c.l.bf16 %v206
  %v208 = vunpack.c.h.bf16 %v206
  %s209 = scalar_lea.vmem %s1, 480
  %s210 = scalar_lea.vmem %s0, 416
  %v211 = vld [vmem:[%s210] sm:$0xf]
  %v212 = vunpack.c.l.bf16 %v211
  %v213 = vunpack.c.h.bf16 %v211
  %s214 = scalar_lea.vmem %s1, 160
  %s215 = scalar_lea.vmem %s0, 224
  %v216 = vld [vmem:[%s215] sm:$0xf]
  %v217 = vunpack.c.l.bf16 %v216
  %v218 = vunpack.c.h.bf16 %v216
  %s219 = scalar_lea.vmem %s1, 352
  %s220 = scalar_lea.vmem %s0, 32
  %v221 = vld [vmem:[%s220] sm:$0xf]
  %v222 = vunpack.c.l.bf16 %v221
  %v223 = vunpack.c.h.bf16 %v221
  %s224 = scalar_lea.vmem %s1, 544
  %s225 = scalar_lea.vmem %s0, 552
  %v226 = vld [vmem:[%s225] sm:$0xf]
  %v227 = vunpack.c.l.bf16 %v226
  %v228 = vunpack.c.h.bf16 %v226
  %s229 = scalar_lea.vmem %s1, 40
  %s230 = scalar_lea.vmem %s0, 360
  %v231 = vld [vmem:[%s230] sm:$0xf]
  %v232 = vunpack.c.l.bf16 %v231
  %v233 = vunpack.c.h.bf16 %v231
  %s234 = scalar_lea.vmem %s1, 232
  %s235 = scalar_lea.vmem %s0, 168
  %v236 = vld [vmem:[%s235] sm:$0xf]
  %v237 = vunpack.c.l.bf16 %v236
  %v238 = vunpack.c.h.bf16 %v236
  %s239 = scalar_lea.vmem %s1, 424
  %s240 = scalar_lea.vmem %s0, 488
  %v241 = vld [vmem:[%s240] sm:$0xf]
  %v242 = vunpack.c.l.bf16 %v241
  %v243 = vunpack.c.h.bf16 %v241
  %s244 = scalar_lea.vmem %s1, 104
  %s245 = scalar_lea.vmem %s0, 296
  %v246 = vld [vmem:[%s245] sm:$0xf]
  %v247 = vunpack.c.l.bf16 %v246
  %v248 = vunpack.c.h.bf16 %v246
  %s249 = scalar_lea.vmem %s1, 296
  %s250 = scalar_lea.vmem %s0, 104
  %v251 = vld [vmem:[%s250] sm:$0xf]
  %v252 = vunpack.c.l.bf16 %v251
  %v253 = vunpack.c.h.bf16 %v251
  %s254 = scalar_lea.vmem %s1, 488
  %s255 = scalar_lea.vmem %s0, 424
  %v256 = vld [vmem:[%s255] sm:$0xf]
  %v257 = vunpack.c.l.bf16 %v256
  %v258 = vunpack.c.h.bf16 %v256
  %s259 = scalar_lea.vmem %s1, 168
  %s260 = scalar_lea.vmem %s0, 232
  %v261 = vld [vmem:[%s260] sm:$0xf]
  %v262 = vunpack.c.l.bf16 %v261
  %v263 = vunpack.c.h.bf16 %v261
  %s264 = scalar_lea.vmem %s1, 360
  %s265 = scalar_lea.vmem %s0, 40
  %v266 = vld [vmem:[%s265] sm:$0xf]
  %v267 = vunpack.c.l.bf16 %v266
  %v268 = vunpack.c.h.bf16 %v266
  %s269 = scalar_lea.vmem %s1, 552
  %s270 = scalar_lea.vmem %s0, 560
  %v271 = vld [vmem:[%s270] sm:$0xf]
  %v272 = vunpack.c.l.bf16 %v271
  %v273 = vunpack.c.h.bf16 %v271
  %s274 = scalar_lea.vmem %s1, 48
  %s275 = scalar_lea.vmem %s0, 368
  %v276 = vld [vmem:[%s275] sm:$0xf]
  %v277 = vunpack.c.l.bf16 %v276
  %v278 = vunpack.c.h.bf16 %v276
  %s279 = scalar_lea.vmem %s1, 240
  %s280 = scalar_lea.vmem %s0, 176
  %v281 = vld [vmem:[%s280] sm:$0xf]
  %v282 = vunpack.c.l.bf16 %v281
  %v283 = vunpack.c.h.bf16 %v281
  %s284 = scalar_lea.vmem %s1, 432
  %s285 = scalar_lea.vmem %s0, 496
  %v286 = vld [vmem:[%s285] sm:$0xf]
  %v287 = vunpack.c.l.bf16 %v286
  %v288 = vunpack.c.h.bf16 %v286
  %s289 = scalar_lea.vmem %s1, 112
  %s290 = scalar_lea.vmem %s0, 304
  %v291 = vld [vmem:[%s290] sm:$0xf]
  %v292 = vunpack.c.l.bf16 %v291
  %v293 = vunpack.c.h.bf16 %v291
  %s294 = scalar_lea.vmem %s1, 304
  %s295 = scalar_lea.vmem %s0, 112
  %v296 = vld [vmem:[%s295] sm:$0xf]
  %v297 = vunpack.c.l.bf16 %v296
  %v298 = vunpack.c.h.bf16 %v296
  %s299 = scalar_lea.vmem %s1, 496
  %s300 = scalar_lea.vmem %s0, 432
  %v301 = vld [vmem:[%s300] sm:$0xf]
  %v302 = vunpack.c.l.bf16 %v301
  %v303 = vunpack.c.h.bf16 %v301
  %s304 = scalar_lea.vmem %s1, 176
  %s305 = scalar_lea.vmem %s0, 240
  %v306 = vld [vmem:[%s305] sm:$0xf]
  %v307 = vunpack.c.l.bf16 %v306
  %v308 = vunpack.c.h.bf16 %v306
  %s309 = scalar_lea.vmem %s1, 368
  %s310 = scalar_lea.vmem %s0, 48
  %v311 = vld [vmem:[%s310] sm:$0xf]
  %v312 = vunpack.c.l.bf16 %v311
  %v313 = vunpack.c.h.bf16 %v311
  %s314 = scalar_lea.vmem %s1, 560
  %s315 = scalar_lea.vmem %s0, 568
  %v316 = vld [vmem:[%s315] sm:$0xf]
  %v317 = vunpack.c.l.bf16 %v316
  %v318 = vunpack.c.h.bf16 %v316
  %s319 = scalar_lea.vmem %s1, 56
  %s320 = scalar_lea.vmem %s0, 376
  %v321 = vld [vmem:[%s320] sm:$0xf]
  %v322 = vunpack.c.l.bf16 %v321
  %v323 = vunpack.c.h.bf16 %v321
  %s324 = scalar_lea.vmem %s1, 248
  %s325 = scalar_lea.vmem %s0, 184
  %v326 = vld [vmem:[%s325] sm:$0xf]
  %v327 = vunpack.c.l.bf16 %v326
  %v328 = vunpack.c.h.bf16 %v326
  %s329 = scalar_lea.vmem %s1, 440
  %s330 = scalar_lea.vmem %s0, 504
  %v331 = vld [vmem:[%s330] sm:$0xf]
  %v332 = vunpack.c.l.bf16 %v331
  %v333 = vunpack.c.h.bf16 %v331
  %s334 = scalar_lea.vmem %s1, 120
  %s335 = scalar_lea.vmem %s0, 312
  %v336 = vld [vmem:[%s335] sm:$0xf]
  %v337 = vunpack.c.l.bf16 %v336
  %v338 = vunpack.c.h.bf16 %v336
  %s339 = scalar_lea.vmem %s1, 312
  %s340 = scalar_lea.vmem %s0, 120
  %v341 = vld [vmem:[%s340] sm:$0xf]
  %v342 = vunpack.c.l.bf16 %v341
  %v343 = vunpack.c.h.bf16 %v341
  %s344 = scalar_lea.vmem %s1, 504
  %s345 = scalar_lea.vmem %s0, 440
  %v346 = vld [vmem:[%s345] sm:$0xf]
  %v347 = vunpack.c.l.bf16 %v346
  %v348 = vunpack.c.h.bf16 %v346
  %s349 = scalar_lea.vmem %s1, 184
  %s350 = scalar_lea.vmem %s0, 248
  %v351 = vld [vmem:[%s350] sm:$0xf]
  %v352 = vunpack.c.l.bf16 %v351
  %v353 = vunpack.c.h.bf16 %v351
  %s354 = scalar_lea.vmem %s1, 376
  %s355 = scalar_lea.vmem %s0, 56
  %v356 = vld [vmem:[%s355] sm:$0xf]
  %v357 = vunpack.c.l.bf16 %v356
  %v358 = vunpack.c.h.bf16 %v356
  %s359 = scalar_lea.vmem %s1, 568
  %s360 = scalar_lea.vmem %s0, 516
  %v361 = vld [vmem:[%s360] sm:$0xf]
  %v362 = vunpack.c.l.bf16 %v361
  %v363 = vunpack.c.h.bf16 %v361
  %s364 = scalar_lea.vmem %s1, 4
  %s366 = ssub.s32 0, 4
  %s367 = scalar_lea.vmem %s364, %s366
  %v368 = vpack.c.bf16 %v362, %v4
  %369 = vst [vmem:[%s367] sm:$0xff] %v368
  %s370 = scalar_lea.vmem %s0, 324
  %v371 = vld [vmem:[%s370] sm:$0xf]
  %v372 = vunpack.c.l.bf16 %v371
  %v373 = vunpack.c.h.bf16 %v371
  %s374 = scalar_lea.vmem %s1, 196
  %s376 = ssub.s32 0, 4
  %s377 = scalar_lea.vmem %s374, %s376
  %v378 = vpack.c.bf16 %v372, %v8
  %379 = vst [vmem:[%s377] sm:$0xff] %v378
  %s380 = scalar_lea.vmem %s0, 132
  %v381 = vld [vmem:[%s380] sm:$0xf]
  %v382 = vunpack.c.l.bf16 %v381
  %v383 = vunpack.c.h.bf16 %v381
  %s384 = scalar_lea.vmem %s1, 388
  %s386 = ssub.s32 0, 4
  %s387 = scalar_lea.vmem %s384, %s386
  %v388 = vpack.c.bf16 %v382, %v13
  %389 = vst [vmem:[%s387] sm:$0xff] %v388
  %s390 = scalar_lea.vmem %s0, 452
  %v391 = vld [vmem:[%s390] sm:$0xf]
  %v392 = vunpack.c.l.bf16 %v391
  %v393 = vunpack.c.h.bf16 %v391
  %s394 = scalar_lea.vmem %s1, 68
  %s396 = ssub.s32 0, 4
  %s397 = scalar_lea.vmem %s394, %s396
  %v398 = vpack.c.bf16 %v392, %v18
  %399 = vst [vmem:[%s397] sm:$0xff] %v398
  %s400 = scalar_lea.vmem %s0, 260
  %v401 = vld [vmem:[%s400] sm:$0xf]
  %v402 = vunpack.c.l.bf16 %v401
  %v403 = vunpack.c.h.bf16 %v401
  %s404 = scalar_lea.vmem %s1, 260
  %s406 = ssub.s32 0, 4
  %s407 = scalar_lea.vmem %s404, %s406
  %v408 = vpack.c.bf16 %v402, %v23
  %409 = vst [vmem:[%s407] sm:$0xff] %v408
  %s410 = scalar_lea.vmem %s0, 68
  %v411 = vld [vmem:[%s410] sm:$0xf]
  %v412 = vunpack.c.l.bf16 %v411
  %v413 = vunpack.c.h.bf16 %v411
  %s414 = scalar_lea.vmem %s1, 452
  %s416 = ssub.s32 0, 4
  %s417 = scalar_lea.vmem %s414, %s416
  %v418 = vpack.c.bf16 %v412, %v28
  %419 = vst [vmem:[%s417] sm:$0xff] %v418
  %s420 = scalar_lea.vmem %s0, 388
  %v421 = vld [vmem:[%s420] sm:$0xf]
  %v422 = vunpack.c.l.bf16 %v421
  %v423 = vunpack.c.h.bf16 %v421
  %s424 = scalar_lea.vmem %s1, 132
  %s426 = ssub.s32 0, 4
  %s427 = scalar_lea.vmem %s424, %s426
  %v428 = vpack.c.bf16 %v422, %v33
  %429 = vst [vmem:[%s427] sm:$0xff] %v428
  %s430 = scalar_lea.vmem %s0, 196
  %v431 = vld [vmem:[%s430] sm:$0xf]
  %v432 = vunpack.c.l.bf16 %v431
  %v433 = vunpack.c.h.bf16 %v431
  %s434 = scalar_lea.vmem %s1, 324
  %s436 = ssub.s32 0, 4
  %s437 = scalar_lea.vmem %s434, %s436
  %v438 = vpack.c.bf16 %v432, %v38
  %439 = vst [vmem:[%s437] sm:$0xff] %v438
  %s440 = scalar_lea.vmem %s0, 4
  %v441 = vld [vmem:[%s440] sm:$0xf]
  %v442 = vunpack.c.l.bf16 %v441
  %v443 = vunpack.c.h.bf16 %v441
  %s444 = scalar_lea.vmem %s1, 516
  %s446 = ssub.s32 0, 4
  %s447 = scalar_lea.vmem %s444, %s446
  %v448 = vpack.c.bf16 %v442, %v42
  %449 = vst [vmem:[%s447] sm:$0xff] %v448
  %s450 = scalar_lea.vmem %s0, 524
  %v451 = vld [vmem:[%s450] sm:$0xf]
  %v452 = vunpack.c.l.bf16 %v451
  %v453 = vunpack.c.h.bf16 %v451
  %s454 = scalar_lea.vmem %s1, 12
  %s456 = ssub.s32 0, 4
  %s457 = scalar_lea.vmem %s454, %s456
  %v458 = vpack.c.bf16 %v452, %v47
  %459 = vst [vmem:[%s457] sm:$0xff] %v458
  %s460 = scalar_lea.vmem %s0, 332
  %v461 = vld [vmem:[%s460] sm:$0xf]
  %v462 = vunpack.c.l.bf16 %v461
  %v463 = vunpack.c.h.bf16 %v461
  %s464 = scalar_lea.vmem %s1, 204
  %s466 = ssub.s32 0, 4
  %s467 = scalar_lea.vmem %s464, %s466
  %v468 = vpack.c.bf16 %v462, %v52
  %469 = vst [vmem:[%s467] sm:$0xff] %v468
  %s470 = scalar_lea.vmem %s0, 140
  %v471 = vld [vmem:[%s470] sm:$0xf]
  %v472 = vunpack.c.l.bf16 %v471
  %v473 = vunpack.c.h.bf16 %v471
  %s474 = scalar_lea.vmem %s1, 396
  %s476 = ssub.s32 0, 4
  %s477 = scalar_lea.vmem %s474, %s476
  %v478 = vpack.c.bf16 %v472, %v57
  %479 = vst [vmem:[%s477] sm:$0xff] %v478
  %s480 = scalar_lea.vmem %s0, 460
  %v481 = vld [vmem:[%s480] sm:$0xf]
  %v482 = vunpack.c.l.bf16 %v481
  %v483 = vunpack.c.h.bf16 %v481
  %s484 = scalar_lea.vmem %s1, 76
  %s486 = ssub.s32 0, 4
  %s487 = scalar_lea.vmem %s484, %s486
  %v488 = vpack.c.bf16 %v482, %v62
  %489 = vst [vmem:[%s487] sm:$0xff] %v488
  %s490 = scalar_lea.vmem %s0, 268
  %v491 = vld [vmem:[%s490] sm:$0xf]
  %v492 = vunpack.c.l.bf16 %v491
  %v493 = vunpack.c.h.bf16 %v491
  %s494 = scalar_lea.vmem %s1, 268
  %s496 = ssub.s32 0, 4
  %s497 = scalar_lea.vmem %s494, %s496
  %v498 = vpack.c.bf16 %v492, %v67
  %499 = vst [vmem:[%s497] sm:$0xff] %v498
  %s500 = scalar_lea.vmem %s0, 76
  %v501 = vld [vmem:[%s500] sm:$0xf]
  %v502 = vunpack.c.l.bf16 %v501
  %v503 = vunpack.c.h.bf16 %v501
  %s504 = scalar_lea.vmem %s1, 460
  %s506 = ssub.s32 0, 4
  %s507 = scalar_lea.vmem %s504, %s506
  %v508 = vpack.c.bf16 %v502, %v72
  %509 = vst [vmem:[%s507] sm:$0xff] %v508
  %s510 = scalar_lea.vmem %s0, 396
  %v511 = vld [vmem:[%s510] sm:$0xf]
  %v512 = vunpack.c.l.bf16 %v511
  %v513 = vunpack.c.h.bf16 %v511
  %s514 = scalar_lea.vmem %s1, 140
  %s516 = ssub.s32 0, 4
  %s517 = scalar_lea.vmem %s514, %s516
  %v518 = vpack.c.bf16 %v512, %v77
  %519 = vst [vmem:[%s517] sm:$0xff] %v518
  %s520 = scalar_lea.vmem %s0, 204
  %v521 = vld [vmem:[%s520] sm:$0xf]
  %v522 = vunpack.c.l.bf16 %v521
  %v523 = vunpack.c.h.bf16 %v521
  %s524 = scalar_lea.vmem %s1, 332
  %s526 = ssub.s32 0, 4
  %s527 = scalar_lea.vmem %s524, %s526
  %v528 = vpack.c.bf16 %v522, %v82
  %529 = vst [vmem:[%s527] sm:$0xff] %v528
  %s530 = scalar_lea.vmem %s0, 12
  %v531 = vld [vmem:[%s530] sm:$0xf]
  %v532 = vunpack.c.l.bf16 %v531
  %v533 = vunpack.c.h.bf16 %v531
  %s534 = scalar_lea.vmem %s1, 524
  %s536 = ssub.s32 0, 4
  %s537 = scalar_lea.vmem %s534, %s536
  %v538 = vpack.c.bf16 %v532, %v87
  %539 = vst [vmem:[%s537] sm:$0xff] %v538
  %s540 = scalar_lea.vmem %s0, 532
  %v541 = vld [vmem:[%s540] sm:$0xf]
  %v542 = vunpack.c.l.bf16 %v541
  %v543 = vunpack.c.h.bf16 %v541
  %s544 = scalar_lea.vmem %s1, 20
  %s546 = ssub.s32 0, 4
  %s547 = scalar_lea.vmem %s544, %s546
  %v548 = vpack.c.bf16 %v542, %v92
  %549 = vst [vmem:[%s547] sm:$0xff] %v548
  %s550 = scalar_lea.vmem %s0, 340
  %v551 = vld [vmem:[%s550] sm:$0xf]
  %v552 = vunpack.c.l.bf16 %v551
  %v553 = vunpack.c.h.bf16 %v551
  %s554 = scalar_lea.vmem %s1, 212
  %s556 = ssub.s32 0, 4
  %s557 = scalar_lea.vmem %s554, %s556
  %v558 = vpack.c.bf16 %v552, %v97
  %559 = vst [vmem:[%s557] sm:$0xff] %v558
  %s560 = scalar_lea.vmem %s0, 148
  %v561 = vld [vmem:[%s560] sm:$0xf]
  %v562 = vunpack.c.l.bf16 %v561
  %v563 = vunpack.c.h.bf16 %v561
  %s564 = scalar_lea.vmem %s1, 404
  %s566 = ssub.s32 0, 4
  %s567 = scalar_lea.vmem %s564, %s566
  %v568 = vpack.c.bf16 %v562, %v102
  %569 = vst [vmem:[%s567] sm:$0xff] %v568
  %s570 = scalar_lea.vmem %s0, 468
  %v571 = vld [vmem:[%s570] sm:$0xf]
  %v572 = vunpack.c.l.bf16 %v571
  %v573 = vunpack.c.h.bf16 %v571
  %s574 = scalar_lea.vmem %s1, 84
  %s576 = ssub.s32 0, 4
  %s577 = scalar_lea.vmem %s574, %s576
  %v578 = vpack.c.bf16 %v572, %v107
  %579 = vst [vmem:[%s577] sm:$0xff] %v578
  %s580 = scalar_lea.vmem %s0, 276
  %v581 = vld [vmem:[%s580] sm:$0xf]
  %v582 = vunpack.c.l.bf16 %v581
  %v583 = vunpack.c.h.bf16 %v581
  %s584 = scalar_lea.vmem %s1, 276
  %s586 = ssub.s32 0, 4
  %s587 = scalar_lea.vmem %s584, %s586
  %v588 = vpack.c.bf16 %v582, %v112
  %589 = vst [vmem:[%s587] sm:$0xff] %v588
  %s590 = scalar_lea.vmem %s0, 84
  %v591 = vld [vmem:[%s590] sm:$0xf]
  %v592 = vunpack.c.l.bf16 %v591
  %v593 = vunpack.c.h.bf16 %v591
  %s594 = scalar_lea.vmem %s1, 468
  %s596 = ssub.s32 0, 4
  %s597 = scalar_lea.vmem %s594, %s596
  %v598 = vpack.c.bf16 %v592, %v117
  %599 = vst [vmem:[%s597] sm:$0xff] %v598
  %s600 = scalar_lea.vmem %s0, 404
  %v601 = vld [vmem:[%s600] sm:$0xf]
  %v602 = vunpack.c.l.bf16 %v601
  %v603 = vunpack.c.h.bf16 %v601
  %s604 = scalar_lea.vmem %s1, 148
  %s606 = ssub.s32 0, 4
  %s607 = scalar_lea.vmem %s604, %s606
  %v608 = vpack.c.bf16 %v602, %v122
  %609 = vst [vmem:[%s607] sm:$0xff] %v608
  %s610 = scalar_lea.vmem %s0, 212
  %v611 = vld [vmem:[%s610] sm:$0xf]
  %v612 = vunpack.c.l.bf16 %v611
  %v613 = vunpack.c.h.bf16 %v611
  %s614 = scalar_lea.vmem %s1, 340
  %s616 = ssub.s32 0, 4
  %s617 = scalar_lea.vmem %s614, %s616
  %v618 = vpack.c.bf16 %v612, %v127
  %619 = vst [vmem:[%s617] sm:$0xff] %v618
  %s620 = scalar_lea.vmem %s0, 20
  %v621 = vld [vmem:[%s620] sm:$0xf]
  %v622 = vunpack.c.l.bf16 %v621
  %v623 = vunpack.c.h.bf16 %v621
  %s624 = scalar_lea.vmem %s1, 532
  %s626 = ssub.s32 0, 4
  %s627 = scalar_lea.vmem %s624, %s626
  %v628 = vpack.c.bf16 %v622, %v132
  %629 = vst [vmem:[%s627] sm:$0xff] %v628
  %s630 = scalar_lea.vmem %s0, 540
  %v631 = vld [vmem:[%s630] sm:$0xf]
  %v632 = vunpack.c.l.bf16 %v631
  %v633 = vunpack.c.h.bf16 %v631
  %s634 = scalar_lea.vmem %s1, 28
  %s636 = ssub.s32 0, 4
  %s637 = scalar_lea.vmem %s634, %s636
  %v638 = vpack.c.bf16 %v632, %v137
  %639 = vst [vmem:[%s637] sm:$0xff] %v638
  %s640 = scalar_lea.vmem %s0, 348
  %v641 = vld [vmem:[%s640] sm:$0xf]
  %v642 = vunpack.c.l.bf16 %v641
  %v643 = vunpack.c.h.bf16 %v641
  %s644 = scalar_lea.vmem %s1, 220
  %s646 = ssub.s32 0, 4
  %s647 = scalar_lea.vmem %s644, %s646
  %v648 = vpack.c.bf16 %v642, %v142
  %649 = vst [vmem:[%s647] sm:$0xff] %v648
  %s650 = scalar_lea.vmem %s0, 156
  %v651 = vld [vmem:[%s650] sm:$0xf]
  %v652 = vunpack.c.l.bf16 %v651
  %v653 = vunpack.c.h.bf16 %v651
  %s654 = scalar_lea.vmem %s1, 412
  %s656 = ssub.s32 0, 4
  %s657 = scalar_lea.vmem %s654, %s656
  %v658 = vpack.c.bf16 %v652, %v147
  %659 = vst [vmem:[%s657] sm:$0xff] %v658
  %s660 = scalar_lea.vmem %s0, 476
  %v661 = vld [vmem:[%s660] sm:$0xf]
  %v662 = vunpack.c.l.bf16 %v661
  %v663 = vunpack.c.h.bf16 %v661
  %s664 = scalar_lea.vmem %s1, 92
  %s666 = ssub.s32 0, 4
  %s667 = scalar_lea.vmem %s664, %s666
  %v668 = vpack.c.bf16 %v662, %v152
  %669 = vst [vmem:[%s667] sm:$0xff] %v668
  %s670 = scalar_lea.vmem %s0, 284
  %v671 = vld [vmem:[%s670] sm:$0xf]
  %v672 = vunpack.c.l.bf16 %v671
  %v673 = vunpack.c.h.bf16 %v671
  %s674 = scalar_lea.vmem %s1, 284
  %s676 = ssub.s32 0, 4
  %s677 = scalar_lea.vmem %s674, %s676
  %v678 = vpack.c.bf16 %v672, %v157
  %679 = vst [vmem:[%s677] sm:$0xff] %v678
  %s680 = scalar_lea.vmem %s0, 92
  %v681 = vld [vmem:[%s680] sm:$0xf]
  %v682 = vunpack.c.l.bf16 %v681
  %v683 = vunpack.c.h.bf16 %v681
  %s684 = scalar_lea.vmem %s1, 476
  %s686 = ssub.s32 0, 4
  %s687 = scalar_lea.vmem %s684, %s686
  %v688 = vpack.c.bf16 %v682, %v162
  %689 = vst [vmem:[%s687] sm:$0xff] %v688
  %s690 = scalar_lea.vmem %s0, 412
  %v691 = vld [vmem:[%s690] sm:$0xf]
  %v692 = vunpack.c.l.bf16 %v691
  %v693 = vunpack.c.h.bf16 %v691
  %s694 = scalar_lea.vmem %s1, 156
  %s696 = ssub.s32 0, 4
  %s697 = scalar_lea.vmem %s694, %s696
  %v698 = vpack.c.bf16 %v692, %v167
  %699 = vst [vmem:[%s697] sm:$0xff] %v698
  %s700 = scalar_lea.vmem %s0, 220
  %v701 = vld [vmem:[%s700] sm:$0xf]
  %v702 = vunpack.c.l.bf16 %v701
  %v703 = vunpack.c.h.bf16 %v701
  %s704 = scalar_lea.vmem %s1, 348
  %s706 = ssub.s32 0, 4
  %s707 = scalar_lea.vmem %s704, %s706
  %v708 = vpack.c.bf16 %v702, %v172
  %709 = vst [vmem:[%s707] sm:$0xff] %v708
  %s710 = scalar_lea.vmem %s0, 28
  %v711 = vld [vmem:[%s710] sm:$0xf]
  %v712 = vunpack.c.l.bf16 %v711
  %v713 = vunpack.c.h.bf16 %v711
  %s714 = scalar_lea.vmem %s1, 540
  %s716 = ssub.s32 0, 4
  %s717 = scalar_lea.vmem %s714, %s716
  %v718 = vpack.c.bf16 %v712, %v177
  %719 = vst [vmem:[%s717] sm:$0xff] %v718
  %s720 = scalar_lea.vmem %s0, 548
  %v721 = vld [vmem:[%s720] sm:$0xf]
  %v722 = vunpack.c.l.bf16 %v721
  %v723 = vunpack.c.h.bf16 %v721
  %s724 = scalar_lea.vmem %s1, 36
  %s726 = ssub.s32 0, 4
  %s727 = scalar_lea.vmem %s724, %s726
  %v728 = vpack.c.bf16 %v722, %v182
  %729 = vst [vmem:[%s727] sm:$0xff] %v728
  %s730 = scalar_lea.vmem %s0, 356
  %v731 = vld [vmem:[%s730] sm:$0xf]
  %v732 = vunpack.c.l.bf16 %v731
  %v733 = vunpack.c.h.bf16 %v731
  %s734 = scalar_lea.vmem %s1, 228
  %s736 = ssub.s32 0, 4
  %s737 = scalar_lea.vmem %s734, %s736
  %v738 = vpack.c.bf16 %v732, %v187
  %739 = vst [vmem:[%s737] sm:$0xff] %v738
  %s740 = scalar_lea.vmem %s0, 164
  %v741 = vld [vmem:[%s740] sm:$0xf]
  %v742 = vunpack.c.l.bf16 %v741
  %v743 = vunpack.c.h.bf16 %v741
  %s744 = scalar_lea.vmem %s1, 420
  %s746 = ssub.s32 0, 4
  %s747 = scalar_lea.vmem %s744, %s746
  %v748 = vpack.c.bf16 %v742, %v192
  %749 = vst [vmem:[%s747] sm:$0xff] %v748
  %s750 = scalar_lea.vmem %s0, 484
  %v751 = vld [vmem:[%s750] sm:$0xf]
  %v752 = vunpack.c.l.bf16 %v751
  %v753 = vunpack.c.h.bf16 %v751
  %s754 = scalar_lea.vmem %s1, 100
  %s756 = ssub.s32 0, 4
  %s757 = scalar_lea.vmem %s754, %s756
  %v758 = vpack.c.bf16 %v752, %v197
  %759 = vst [vmem:[%s757] sm:$0xff] %v758
  %s760 = scalar_lea.vmem %s0, 292
  %v761 = vld [vmem:[%s760] sm:$0xf]
  %v762 = vunpack.c.l.bf16 %v761
  %v763 = vunpack.c.h.bf16 %v761
  %s764 = scalar_lea.vmem %s1, 292
  %s766 = ssub.s32 0, 4
  %s767 = scalar_lea.vmem %s764, %s766
  %v768 = vpack.c.bf16 %v762, %v202
  %769 = vst [vmem:[%s767] sm:$0xff] %v768
  %s770 = scalar_lea.vmem %s0, 100
  %v771 = vld [vmem:[%s770] sm:$0xf]
  %v772 = vunpack.c.l.bf16 %v771
  %v773 = vunpack.c.h.bf16 %v771
  %s774 = scalar_lea.vmem %s1, 484
  %s776 = ssub.s32 0, 4
  %s777 = scalar_lea.vmem %s774, %s776
  %v778 = vpack.c.bf16 %v772, %v207
  %779 = vst [vmem:[%s777] sm:$0xff] %v778
  %s780 = scalar_lea.vmem %s0, 420
  %v781 = vld [vmem:[%s780] sm:$0xf]
  %v782 = vunpack.c.l.bf16 %v781
  %v783 = vunpack.c.h.bf16 %v781
  %s784 = scalar_lea.vmem %s1, 164
  %s786 = ssub.s32 0, 4
  %s787 = scalar_lea.vmem %s784, %s786
  %v788 = vpack.c.bf16 %v782, %v212
  %789 = vst [vmem:[%s787] sm:$0xff] %v788
  %s790 = scalar_lea.vmem %s0, 228
  %v791 = vld [vmem:[%s790] sm:$0xf]
  %v792 = vunpack.c.l.bf16 %v791
  %v793 = vunpack.c.h.bf16 %v791
  %s794 = scalar_lea.vmem %s1, 356
  %s796 = ssub.s32 0, 4
  %s797 = scalar_lea.vmem %s794, %s796
  %v798 = vpack.c.bf16 %v792, %v217
  %799 = vst [vmem:[%s797] sm:$0xff] %v798
  %s800 = scalar_lea.vmem %s0, 36
  %v801 = vld [vmem:[%s800] sm:$0xf]
  %v802 = vunpack.c.l.bf16 %v801
  %v803 = vunpack.c.h.bf16 %v801
  %s804 = scalar_lea.vmem %s1, 548
  %s806 = ssub.s32 0, 4
  %s807 = scalar_lea.vmem %s804, %s806
  %v808 = vpack.c.bf16 %v802, %v222
  %809 = vst [vmem:[%s807] sm:$0xff] %v808
  %s810 = scalar_lea.vmem %s0, 556
  %v811 = vld [vmem:[%s810] sm:$0xf]
  %v812 = vunpack.c.l.bf16 %v811
  %v813 = vunpack.c.h.bf16 %v811
  %s814 = scalar_lea.vmem %s1, 44
  %s816 = ssub.s32 0, 4
  %s817 = scalar_lea.vmem %s814, %s816
  %v818 = vpack.c.bf16 %v812, %v227
  %819 = vst [vmem:[%s817] sm:$0xff] %v818
  %s820 = scalar_lea.vmem %s0, 364
  %v821 = vld [vmem:[%s820] sm:$0xf]
  %v822 = vunpack.c.l.bf16 %v821
  %v823 = vunpack.c.h.bf16 %v821
  %s824 = scalar_lea.vmem %s1, 236
  %s826 = ssub.s32 0, 4
  %s827 = scalar_lea.vmem %s824, %s826
  %v828 = vpack.c.bf16 %v822, %v232
  %829 = vst [vmem:[%s827] sm:$0xff] %v828
  %s830 = scalar_lea.vmem %s0, 172
  %v831 = vld [vmem:[%s830] sm:$0xf]
  %v832 = vunpack.c.l.bf16 %v831
  %v833 = vunpack.c.h.bf16 %v831
  %s834 = scalar_lea.vmem %s1, 428
  %s836 = ssub.s32 0, 4
  %s837 = scalar_lea.vmem %s834, %s836
  %v838 = vpack.c.bf16 %v832, %v237
  %839 = vst [vmem:[%s837] sm:$0xff] %v838
  %s840 = scalar_lea.vmem %s0, 492
  %v841 = vld [vmem:[%s840] sm:$0xf]
  %v842 = vunpack.c.l.bf16 %v841
  %v843 = vunpack.c.h.bf16 %v841
  %s844 = scalar_lea.vmem %s1, 108
  %s846 = ssub.s32 0, 4
  %s847 = scalar_lea.vmem %s844, %s846
  %v848 = vpack.c.bf16 %v842, %v242
  %849 = vst [vmem:[%s847] sm:$0xff] %v848
  %s850 = scalar_lea.vmem %s0, 300
  %v851 = vld [vmem:[%s850] sm:$0xf]
  %v852 = vunpack.c.l.bf16 %v851
  %v853 = vunpack.c.h.bf16 %v851
  %s854 = scalar_lea.vmem %s1, 300
  %s856 = ssub.s32 0, 4
  %s857 = scalar_lea.vmem %s854, %s856
  %v858 = vpack.c.bf16 %v852, %v247
  %859 = vst [vmem:[%s857] sm:$0xff] %v858
  %s860 = scalar_lea.vmem %s0, 108
  %v861 = vld [vmem:[%s860] sm:$0xf]
  %v862 = vunpack.c.l.bf16 %v861
  %v863 = vunpack.c.h.bf16 %v861
  %s864 = scalar_lea.vmem %s1, 492
  %s866 = ssub.s32 0, 4
  %s867 = scalar_lea.vmem %s864, %s866
  %v868 = vpack.c.bf16 %v862, %v252
  %869 = vst [vmem:[%s867] sm:$0xff] %v868
  %s870 = scalar_lea.vmem %s0, 428
  %v871 = vld [vmem:[%s870] sm:$0xf]
  %v872 = vunpack.c.l.bf16 %v871
  %v873 = vunpack.c.h.bf16 %v871
  %s874 = scalar_lea.vmem %s1, 172
  %s876 = ssub.s32 0, 4
  %s877 = scalar_lea.vmem %s874, %s876
  %v878 = vpack.c.bf16 %v872, %v257
  %879 = vst [vmem:[%s877] sm:$0xff] %v878
  %s880 = scalar_lea.vmem %s0, 236
  %v881 = vld [vmem:[%s880] sm:$0xf]
  %v882 = vunpack.c.l.bf16 %v881
  %v883 = vunpack.c.h.bf16 %v881
  %s884 = scalar_lea.vmem %s1, 364
  %s886 = ssub.s32 0, 4
  %s887 = scalar_lea.vmem %s884, %s886
  %v888 = vpack.c.bf16 %v882, %v262
  %889 = vst [vmem:[%s887] sm:$0xff] %v888
  %s890 = scalar_lea.vmem %s0, 44
  %v891 = vld [vmem:[%s890] sm:$0xf]
  %v892 = vunpack.c.l.bf16 %v891
  %v893 = vunpack.c.h.bf16 %v891
  %s894 = scalar_lea.vmem %s1, 556
  %s896 = ssub.s32 0, 4
  %s897 = scalar_lea.vmem %s894, %s896
  %v898 = vpack.c.bf16 %v892, %v267
  %899 = vst [vmem:[%s897] sm:$0xff] %v898
  %s900 = scalar_lea.vmem %s0, 564
  %v901 = vld [vmem:[%s900] sm:$0xf]
  %v902 = vunpack.c.l.bf16 %v901
  %v903 = vunpack.c.h.bf16 %v901
  %s904 = scalar_lea.vmem %s1, 52
  %s906 = ssub.s32 0, 4
  %s907 = scalar_lea.vmem %s904, %s906
  %v908 = vpack.c.bf16 %v902, %v272
  %909 = vst [vmem:[%s907] sm:$0xff] %v908
  %s910 = scalar_lea.vmem %s0, 372
  %v911 = vld [vmem:[%s910] sm:$0xf]
  %v912 = vunpack.c.l.bf16 %v911
  %v913 = vunpack.c.h.bf16 %v911
  %s914 = scalar_lea.vmem %s1, 244
  %s916 = ssub.s32 0, 4
  %s917 = scalar_lea.vmem %s914, %s916
  %v918 = vpack.c.bf16 %v912, %v277
  %919 = vst [vmem:[%s917] sm:$0xff] %v918
  %s920 = scalar_lea.vmem %s0, 180
  %v921 = vld [vmem:[%s920] sm:$0xf]
  %v922 = vunpack.c.l.bf16 %v921
  %v923 = vunpack.c.h.bf16 %v921
  %s924 = scalar_lea.vmem %s1, 436
  %s926 = ssub.s32 0, 4
  %s927 = scalar_lea.vmem %s924, %s926
  %v928 = vpack.c.bf16 %v922, %v282
  %929 = vst [vmem:[%s927] sm:$0xff] %v928
  %s930 = scalar_lea.vmem %s0, 500
  %v931 = vld [vmem:[%s930] sm:$0xf]
  %v932 = vunpack.c.l.bf16 %v931
  %v933 = vunpack.c.h.bf16 %v931
  %s934 = scalar_lea.vmem %s1, 116
  %s936 = ssub.s32 0, 4
  %s937 = scalar_lea.vmem %s934, %s936
  %v938 = vpack.c.bf16 %v932, %v287
  %939 = vst [vmem:[%s937] sm:$0xff] %v938
  %s940 = scalar_lea.vmem %s0, 308
  %v941 = vld [vmem:[%s940] sm:$0xf]
  %v942 = vunpack.c.l.bf16 %v941
  %v943 = vunpack.c.h.bf16 %v941
  %s944 = scalar_lea.vmem %s1, 308
  %s946 = ssub.s32 0, 4
  %s947 = scalar_lea.vmem %s944, %s946
  %v948 = vpack.c.bf16 %v942, %v292
  %949 = vst [vmem:[%s947] sm:$0xff] %v948
  %s950 = scalar_lea.vmem %s0, 116
  %v951 = vld [vmem:[%s950] sm:$0xf]
  %v952 = vunpack.c.l.bf16 %v951
  %v953 = vunpack.c.h.bf16 %v951
  %s954 = scalar_lea.vmem %s1, 500
  %s956 = ssub.s32 0, 4
  %s957 = scalar_lea.vmem %s954, %s956
  %v958 = vpack.c.bf16 %v952, %v297
  %959 = vst [vmem:[%s957] sm:$0xff] %v958
  %s960 = scalar_lea.vmem %s0, 436
  %v961 = vld [vmem:[%s960] sm:$0xf]
  %v962 = vunpack.c.l.bf16 %v961
  %v963 = vunpack.c.h.bf16 %v961
  %s964 = scalar_lea.vmem %s1, 180
  %s966 = ssub.s32 0, 4
  %s967 = scalar_lea.vmem %s964, %s966
  %v968 = vpack.c.bf16 %v962, %v302
  %969 = vst [vmem:[%s967] sm:$0xff] %v968
  %s970 = scalar_lea.vmem %s0, 244
  %v971 = vld [vmem:[%s970] sm:$0xf]
  %v972 = vunpack.c.l.bf16 %v971
  %v973 = vunpack.c.h.bf16 %v971
  %s974 = scalar_lea.vmem %s1, 372
  %s976 = ssub.s32 0, 4
  %s977 = scalar_lea.vmem %s974, %s976
  %v978 = vpack.c.bf16 %v972, %v307
  %979 = vst [vmem:[%s977] sm:$0xff] %v978
  %s980 = scalar_lea.vmem %s0, 52
  %v981 = vld [vmem:[%s980] sm:$0xf]
  %v982 = vunpack.c.l.bf16 %v981
  %v983 = vunpack.c.h.bf16 %v981
  %s984 = scalar_lea.vmem %s1, 564
  %s986 = ssub.s32 0, 4
  %s987 = scalar_lea.vmem %s984, %s986
  %v988 = vpack.c.bf16 %v982, %v312
  %989 = vst [vmem:[%s987] sm:$0xff] %v988
  %s990 = scalar_lea.vmem %s0, 572
  %v991 = vld [vmem:[%s990] sm:$0xf]
  %v992 = vunpack.c.l.bf16 %v991
  %v993 = vunpack.c.h.bf16 %v991
  %s994 = scalar_lea.vmem %s1, 60
  %s996 = ssub.s32 0, 4
  %s997 = scalar_lea.vmem %s994, %s996
  %v998 = vpack.c.bf16 %v992, %v317
  %999 = vst [vmem:[%s997] sm:$0xff] %v998
  %s1000 = scalar_lea.vmem %s0, 380
  %v1001 = vld [vmem:[%s1000] sm:$0xf]
  %v1002 = vunpack.c.l.bf16 %v1001
  %v1003 = vunpack.c.h.bf16 %v1001
  %s1004 = scalar_lea.vmem %s1, 252
  %s1006 = ssub.s32 0, 4
  %s1007 = scalar_lea.vmem %s1004, %s1006
  %v1008 = vpack.c.bf16 %v1002, %v322
  %1009 = vst [vmem:[%s1007] sm:$0xff] %v1008
  %s1010 = scalar_lea.vmem %s0, 188
  %v1011 = vld [vmem:[%s1010] sm:$0xf]
  %v1012 = vunpack.c.l.bf16 %v1011
  %v1013 = vunpack.c.h.bf16 %v1011
  %s1014 = scalar_lea.vmem %s1, 444
  %s1016 = ssub.s32 0, 4
  %s1017 = scalar_lea.vmem %s1014, %s1016
  %v1018 = vpack.c.bf16 %v1012, %v327
  %1019 = vst [vmem:[%s1017] sm:$0xff] %v1018
  %s1020 = scalar_lea.vmem %s0, 508
  %v1021 = vld [vmem:[%s1020] sm:$0xf]
  %v1022 = vunpack.c.l.bf16 %v1021
  %v1023 = vunpack.c.h.bf16 %v1021
  %s1024 = scalar_lea.vmem %s1, 124
  %s1026 = ssub.s32 0, 4
  %s1027 = scalar_lea.vmem %s1024, %s1026
  %v1028 = vpack.c.bf16 %v1022, %v332
  %1029 = vst [vmem:[%s1027] sm:$0xff] %v1028
  %s1030 = scalar_lea.vmem %s0, 316
  %v1031 = vld [vmem:[%s1030] sm:$0xf]
  %v1032 = vunpack.c.l.bf16 %v1031
  %v1033 = vunpack.c.h.bf16 %v1031
  %s1034 = scalar_lea.vmem %s1, 316
  %s1036 = ssub.s32 0, 4
  %s1037 = scalar_lea.vmem %s1034, %s1036
  %v1038 = vpack.c.bf16 %v1032, %v337
  %1039 = vst [vmem:[%s1037] sm:$0xff] %v1038
  %s1040 = scalar_lea.vmem %s0, 124
  %v1041 = vld [vmem:[%s1040] sm:$0xf]
  %v1042 = vunpack.c.l.bf16 %v1041
  %v1043 = vunpack.c.h.bf16 %v1041
  %s1044 = scalar_lea.vmem %s1, 508
  %s1046 = ssub.s32 0, 4
  %s1047 = scalar_lea.vmem %s1044, %s1046
  %v1048 = vpack.c.bf16 %v1042, %v342
  %1049 = vst [vmem:[%s1047] sm:$0xff] %v1048
  %s1050 = scalar_lea.vmem %s0, 444
  %v1051 = vld [vmem:[%s1050] sm:$0xf]
  %v1052 = vunpack.c.l.bf16 %v1051
  %v1053 = vunpack.c.h.bf16 %v1051
  %s1054 = scalar_lea.vmem %s1, 188
  %s1056 = ssub.s32 0, 4
  %s1057 = scalar_lea.vmem %s1054, %s1056
  %v1058 = vpack.c.bf16 %v1052, %v347
  %1059 = vst [vmem:[%s1057] sm:$0xff] %v1058
  %s1060 = scalar_lea.vmem %s0, 252
  %v1061 = vld [vmem:[%s1060] sm:$0xf]
  %v1062 = vunpack.c.l.bf16 %v1061
  %v1063 = vunpack.c.h.bf16 %v1061
  %s1064 = scalar_lea.vmem %s1, 380
  %s1066 = ssub.s32 0, 4
  %s1067 = scalar_lea.vmem %s1064, %s1066
  %v1068 = vpack.c.bf16 %v1062, %v352
  %1069 = vst [vmem:[%s1067] sm:$0xff] %v1068
  %s1070 = scalar_lea.vmem %s0, 60
  %v1071 = vld [vmem:[%s1070] sm:$0xf]
  %v1072 = vunpack.c.l.bf16 %v1071
  %v1073 = vunpack.c.h.bf16 %v1071
  %s1074 = scalar_lea.vmem %s1, 572
  %s1076 = ssub.s32 0, 4
  %s1077 = scalar_lea.vmem %s1074, %s1076
  %v1078 = vpack.c.bf16 %v1072, %v357
  %1079 = vst [vmem:[%s1077] sm:$0xff] %v1078

// kernel: squeeze.3
$region0: #{squeeze.3}
  %s0 = inlined_call_operand.vmem [shape: f32[8], index: 0, kind: input, shape index: {}]
  %s1 = inlined_call_operand.hbm [shape: f32[2,4], index: 1, kind: output, shape index: {}]
  $region1: #{squeeze.3} parent=0
    #allocation0 [shape = 'u8[1024]{0}', space=vmem, size = 0x400, scoped, tag = 'operand span for operand 1']
    #allocation1 [shape = 's32[1]{0}', space=sflag, size = 0x4, scoped, tag = 'scoped memory for squeeze.3']
    #allocation2 [shape = 'u8[4096]{0}', space=vmem, size = 0x1000, scoped, tag = 'scoped mem for output reshape']
    #allocation3 [shape = 'u8[4096]{0}', space=vmem, size = 0x1000, scoped, tag = 'scoped mem for input reshape']
    %2 = vsyncpa [#allocation1], 0
    %s4 = sshllo.u32 0, 1
    %v5 = vld [vmem:[%s0] sm:%s4]
    %6 = vst [vmem:[#allocation3] sm:%s4] %v5
    %v7 = vld [vmem:[#allocation3] sm:$0x1]
    %vm8 = vcmask 31744
    %9 = vst.msk [vmem:[#allocation2] sm:$0x1] %vm8, %v7
    %v10 = vld [vmem:[#allocation3] sm:$0x1]
    %11 = vrot.lane.b32.xlu0 %v10, 124
    %v12 = vpop.permute.xlu0 %11
    %vm13 = vcmask 31744
    %s14 = scalar_lea.vmem [#allocation2], 1
    %15 = vst.msk [vmem:[%s14] sm:$0x1] %vm13, %v12
    %s17 = sshllo.u32 0, 2
    %v19 = vld [vmem:[#allocation2] sm:%s17]
    %s20 = sshllo.u32 0, 2
    %21 = vst [vmem:[#allocation0] sm:%s20] %v19
    %s23 = ssub.s32 32, 32
    %24 = vsyncadd [#allocation1], %s23
    %s26 = sshll.u32 [#allocation0], 4
    %s27 = int_to_ptr.vmem [resolvable:$true] %s26
    %29 = dma.vmem_to_hbm [thread:$0]  %s27, 32, %s1, [#allocation1]
    %30 = dma.done [#allocation1], 32
    %31 = vsyncpa [#allocation1], 1

// kernel: relation_forward.3
$region0: #{relation_forward.3}
  #allocation0 [shape = 'u32[]', space=smem, size = 0x4, offset = 0x4, fixed_abs, tag = 'smem constant byte address 0x4 - core index']
  #allocation1 [shape = 'u32[144,128]{1,0:T(1,128)}', space=vmem, size = 0x12000, scoped, tag = 'internal scratch']
  #allocation2 [shape = 'f32[1,1]{1,0:T(1,128)S(1)}', space=vmem, size = 0x200, scoped, tag = 'scoped memory for relation_forward.3']
  %s0 = inlined_call_operand.vmem [shape: bf16[16,64], index: 0, kind: input, shape index: {}]
  %s1 = inlined_call_operand.vmem [shape: f32[1,64], index: 1, kind: input, shape index: {}]
  %s2 = inlined_call_operand.vmem [shape: f32[1,64], index: 2, kind: input, shape index: {}]
  %s3 = inlined_call_operand.vmem [shape: f32[64,8], index: 3, kind: input, shape index: {}]
  %s4 = inlined_call_operand.vmem [shape: f32[1,8], index: 4, kind: input, shape index: {}]
  %s5 = inlined_call_operand.vmem [shape: f32[1,8], index: 5, kind: input, shape index: {}]
  %s6 = inlined_call_operand.<no memory space> [shape: f32[1,1], index: 6, kind: input, shape index: {}]
  %s7 = inlined_call_operand.vmem [shape: f32[16,1], index: 7, kind: output, shape index: {}]
  %s8 = sld [smem:[#allocation0]]
  $region38: #{relation_forward.3} parent=0
    _
  %s10 = ssub.s32 1, %s8
  %s11 = scalar_select 0, %s10, %s8
  %v12 = vstv %s6
  %13 = vst [vmem:[#allocation2] sm:$0x1] %v12
  // Predicated region
  $region2: #{relation_forward.3} parent=0 // pred_check
    _
  $region3: #{relation_forward.3} parent=0 // pred_check_branch
    %15 = sbr.rel (0) target = $region5
  $region4: #{relation_forward.3} parent=0 // pred_region
    _
  $region5: #{relation_forward.3} parent=0 // pred_fallthru
    _
  // Predicated region
  $region6: #{relation_forward.3} parent=0 // pred_check
    _
  $region7: #{relation_forward.3} parent=0 // pred_check_branch
    %17 = sbr.rel (0) target = $region9
  $region8: #{relation_forward.3} parent=0 // pred_region
    _
  $region9: #{relation_forward.3} parent=0 // pred_fallthru
    _
  // Predicated region
  $region10: #{relation_forward.3} parent=0 // pred_check
    _
  $region11: #{relation_forward.3} parent=0 // pred_check_branch
    %19 = sbr.rel (0) target = $region13
  $region12: #{relation_forward.3} parent=0 // pred_region
    _
  $region13: #{relation_forward.3} parent=0 // pred_fallthru
    _
  // Predicated region
  $region14: #{relation_forward.3} parent=0 // pred_check
    _
  $region15: #{relation_forward.3} parent=0 // pred_check_branch
    %21 = sbr.rel (0) target = $region17
  $region16: #{relation_forward.3} parent=0 // pred_region
    _
  $region17: #{relation_forward.3} parent=0 // pred_fallthru
    _
  // Predicated region
  $region18: #{relation_forward.3} parent=0 // pred_check
    _
  $region19: #{relation_forward.3} parent=0 // pred_check_branch
    %23 = sbr.rel (0) target = $region21
  $region20: #{relation_forward.3} parent=0 // pred_region
    _
  $region21: #{relation_forward.3} parent=0 // pred_fallthru
    _
  // Predicated region
  $region22: #{relation_forward.3} parent=0 // pred_check
    _
  $region23: #{relation_forward.3} parent=0 // pred_check_branch
    %25 = sbr.rel (0) target = $region25
  $region24: #{relation_forward.3} parent=0 // pred_region
    _
  $region25: #{relation_forward.3} parent=0 // pred_fallthru
    _
  // Predicated region
  $region26: #{relation_forward.3} parent=0 // pred_check
    _
  $region27: #{relation_forward.3} parent=0 // pred_check_branch
    %27 = sbr.rel (0) target = $region29
  $region28: #{relation_forward.3} parent=0 // pred_region
    _
  $region29: #{relation_forward.3} parent=0 // pred_fallthru
    _
  %v28 = vld [vmem:[%s0] sm:$0xf]
  %v29 = vld [vmem:[%s0 + $0x4] sm:$0xf]
  %v30 = vunpack.c.l.bf16 %v28
  %v31 = vunpack.c.l.bf16 %v29
  %v32 = vld [vmem:[%s1] sm:$0x1]
  %v34 = vlaneseq
  %v35 = vshrl.u32 %v34, 7
  %v36 = vsub.s32 0, %v35
  %v37 = vrot.slane %v32, %v36
  %v39 = vmul.f32 %v30, %v37
  %v40 = vmul.f32 %v31, %v37
  %v41 = vld [vmem:[%s2] sm:$0x1]
  %v43 = vlaneseq
  %v44 = vshrl.u32 %v43, 7
  %v45 = vsub.s32 0, %v44
  %v46 = vrot.slane %v41, %v45
  %v48 = vadd.f32 %v39, %v46
  %v49 = vadd.f32 %v40, %v46
  %v50 = vmax.f32 %v48, 0.0
  %v51 = vmax.f32 %v49, 0.0
  %v52 = vld [vmem:[%s3] sm:$0xff]
  %v53 = vld [vmem:[%s3 + $0x8] sm:$0xff]
  %v54 = vld [vmem:[%s3 + $0x10] sm:$0xff]
  %v55 = vld [vmem:[%s3 + $0x18] sm:$0xff]
  %v56 = vld [vmem:[%s3 + $0x20] sm:$0xff]
  %v57 = vld [vmem:[%s3 + $0x28] sm:$0xff]
  %v58 = vld [vmem:[%s3 + $0x30] sm:$0xff]
  %v59 = vld [vmem:[%s3 + $0x38] sm:$0xff]
  %v60 = vld [vmem:[%s4] sm:$0x1]
  %v62 = vlaneseq
  %v63 = vshrl.u32 %v62, 7
  %v64 = vsub.s32 0, %v63
  %v65 = vrot.slane %v60, %v64
  %vm67 = vcmask 523264
  %v69 = vsel %vm67, %v50, 0
  %v72 = vsel %vm67, %v51, 0
  %74 = vmatprep.subr.mxu0 0.0
  %75 = vmatpush1.msra.mxu0 %v52
  %76 = vmatprep.subr.mxu0 0.0
  %77 = vmatpush1.msra.mxu0 %v53
  %78 = vmatprep.subr.mxu0 0.0
  %79 = vmatpush1.msra.mxu0 %v54
  %80 = vmatprep.subr.mxu0 0.0
  %81 = vmatpush1.msra.mxu0 %v55
  %82 = vmatprep.subr.mxu0 0.0
  %83 = vmatpush1.msra.mxu0 %v56
  %84 = vmatprep.subr.mxu0 0.0
  %85 = vmatpush1.msra.mxu0 %v57
  %86 = vmatprep.subr.mxu0 0.0
  %87 = vmatpush1.msra.mxu0 %v58
  %88 = vmatprep.subr.mxu0 0.0
  %89 = vmatpush1.msra.mxu0 %v59
  %90 = vmatprep.subr.mxu0 0.0
  %91 = vmatpush1.msra.mxu0 0.0
  %92 = vmatprep.subr.mxu0 0.0
  %93 = vmatpush1.msra.mxu0 0.0
  %94 = vmatprep.subr.mxu0 0.0
  %95 = vmatpush1.msra.mxu0 0.0
  %96 = vmatprep.subr.mxu0 0.0
  %97 = vmatpush1.msra.mxu0 0.0
  %98 = vmatprep.subr.mxu0 0.0
  %99 = vmatpush1.msra.mxu0 0.0
  %100 = vmatprep.subr.mxu0 0.0
  %101 = vmatpush1.msra.mxu0 0.0
  %102 = vmatprep.subr.mxu0 0.0
  %103 = vmatpush1.msra.mxu0 0.0
  %104 = vmatprep.subr.mxu0 0.0
  %105 = vmatpush1.msra.mxu0 0.0
  %106 = vmatprep.subr.mxu0 0.0
  %107 = vmatpush1.msra.mxu0 0.0
  %108 = vmatprep.subr.mxu0 0.0
  %109 = vmatpush1.msra.mxu0 0.0
  %110 = vmatprep.subr.mxu0 0.0
  %111 = vmatpush1.msra.mxu0 0.0
  %112 = vmatprep.subr.mxu0 0.0
  %113 = vmatpush1.msra.mxu0 0.0
  %114 = vmatprep.subr.mxu0 0.0
  %115 = vmatpush1.msra.mxu0 0.0
  %116 = vmatprep.subr.mxu0 0.0
  %117 = vmatpush1.msra.mxu0 0.0
  %118 = vmatprep.subr.mxu0 0.0
  %119 = vmatpush1.msra.mxu0 0.0
  %120 = vmatprep.subr.mxu0 0.0
  %121 = vmatpush1.msra.mxu0 0.0
  %122 = vmatprep.subr.mxu0 0.0
  %123 = vmatpush1.msra.mxu0 0.0
  %124 = vmatprep.subr.mxu0 0.0
  %125 = vmatpush1.msra.mxu0 0.0
  %126 = vmatprep.subr.mxu0 0.0
  %127 = vmatpush1.msra.mxu0 0.0
  %128 = vmatprep.subr.mxu0 0.0
  %129 = vmatpush1.msra.mxu0 0.0
  %130 = vmatprep.subr.mxu0 0.0
  %131 = vmatpush1.msra.mxu0 0.0
  %132 = vmatprep.subr.mxu0 0.0
  %133 = vmatpush1.msra.mxu0 0.0
  %134 = vmatprep.subr.mxu0 0.0
  %135 = vmatpush1.msra.mxu0 0.0
  %136 = vmatprep.subr.mxu0 0.0
  %137 = vmatpush1.msra.mxu0 0.0
  %138 = vmatprep.mubr.f32.mxu0 0.0
  %139 = vmatmul.mubr.f32.gmra.mrb[0].mxu0 %v69
  %v140 = vpop.f32.mrb[0].mxu0
  %v141 = vadd.f32 %v65, %v140
  %v142 = vpop.f32.mrb[0].mxu0
  %143 = vmatprep.mubr.f32.mxu0 0.0
  %144 = vmatmul.mubr.f32.gmra.mrb[0].mxu0 %v72
  %v145 = vpop.f32.mrb[0].mxu0
  %v146 = vadd.f32 %v65, %v145
  %v147 = vpop.f32.mrb[0].mxu0
  %148 = vdwg.mxu0
  %v149 = vmax.f32 %v141, 0.0
  %v150 = vmax.f32 %v146, 0.0
  %v151 = vld [vmem:[%s5] sm:$0x1]
  %v153 = vlaneseq
  %v154 = vshrl.u32 %v153, 7
  %v155 = vsub.s32 0, %v154
  %v156 = vrot.slane %v151, %v155
  %v158 = vmul.f32 %v149, %v156
  %v159 = vmul.f32 %v150, %v156
  %vm160 = vcmask 64512
  %v161 = vsel %vm160, %v158, 0.0
  %162 = vadd.xlane.f32.xlu0 %v161
  %v163 = vpop.xlane.xlu0 %162
  %v164 = vsel %vm160, %v159, 0.0
  %165 = vadd.xlane.f32.xlu0 %v164
  %v166 = vpop.xlane.xlu0 %165
  %v167 = vld [vmem:[#allocation2] sm:$0x1]
  %v169 = vlaneseq
  %v170 = vshrl.u32 %v169, 7
  %v171 = vsub.s32 0, %v170
  %v172 = vrot.slane %v167, %v171
  %v174 = vadd.f32 %v163, %v172
  %v175 = vadd.f32 %v166, %v172
  %v176 = vxor.u32 %v174, 2147483648
  %v177 = vxor.u32 %v175, 2147483648
  %v178 = vmul.f32 %v176, 1.442695
  %v179 = vpow.pop %v178
  %v180 = vmul.f32 %v177, 1.442695
  %v181 = vpow.pop %v180
  %v182 = vadd.f32 %v179, 1.0
  %v183 = vadd.f32 %v181, 1.0
  %v184 = vrcp.pop %v182
  %v185 = vmul.f32 1.0, %v184
  %v186 = vrcp.pop %v183
  %v187 = vmul.f32 1.0, %v186
  %vm188 = vcmask 7168
  %189 = vst.msk [vmem:[%s7] sm:$0xff] %vm188, %v185
  %190 = vst.msk [vmem:[%s7 + $0x8] sm:$0xff] %vm188, %v187
  // Predicated region
  $region30: #{relation_forward.3} parent=0 // pred_check
    _
  $region31: #{relation_forward.3} parent=0 // pred_check_branch
    %192 = sbr.rel (0) target = $region33
  $region32: #{relation_forward.3} parent=0 // pred_region
    _
  $region33: #{relation_forward.3} parent=0 // pred_fallthru
    _
  // Predicated region
  $region34: #{relation_forward.3} parent=0 // pred_check
    _
  $region35: #{relation_forward.3} parent=0 // pred_check_branch
    %194 = sbr.rel (0) target = $region37
  $region36: #{relation_forward.3} parent=0 // pred_region
    _
  $region37: #{relation_forward.3} parent=0 // pred_fallthru
    _

// kernel: relation_forward.2
$region0: #{relation_forward.2}
  #allocation0 [shape = 'u32[]', space=smem, size = 0x4, offset = 0x4, fixed_abs, tag = 'smem constant byte address 0x4 - core index']
  #allocation1 [shape = 'u32[144,128]{1,0:T(1,128)}', space=vmem, size = 0x12000, scoped, tag = 'internal scratch']
  %s0 = inlined_call_operand.vmem [shape: f32[8,256], index: 0, kind: input, shape index: {}]
  %s1 = inlined_call_operand.vmem [shape: f32[16,256], index: 1, kind: input, shape index: {}]
  %s2 = inlined_call_operand.vmem [shape: bf16[64,64], index: 2, kind: input, shape index: {}]
  %s3 = inlined_call_operand.vmem [shape: bf16[8,16,64], index: 3, kind: output, shape index: {}]
  %s4 = sld [smem:[#allocation0]]
  $region22: #{relation_forward.2} parent=0
    _
  %s6 = ssub.s32 1, %s4
  %s7 = scalar_select 0, %s6, %s4
  // Predicated region
  $region2: #{relation_forward.2} parent=0 // pred_check
    _
  $region3: #{relation_forward.2} parent=0 // pred_check_branch
    %9 = sbr.rel (0) target = $region5
  $region4: #{relation_forward.2} parent=0 // pred_region
    _
  $region5: #{relation_forward.2} parent=0 // pred_fallthru
    _
  // Predicated region
  $region6: #{relation_forward.2} parent=0 // pred_check
    _
  $region7: #{relation_forward.2} parent=0 // pred_check_branch
    %11 = sbr.rel (0) target = $region9
  $region8: #{relation_forward.2} parent=0 // pred_region
    _
  $region9: #{relation_forward.2} parent=0 // pred_fallthru
    _
  // Predicated region
  $region10: #{relation_forward.2} parent=0 // pred_check
    _
  $region11: #{relation_forward.2} parent=0 // pred_check_branch
    %13 = sbr.rel (0) target = $region13
  $region12: #{relation_forward.2} parent=0 // pred_region
    _
  $region13: #{relation_forward.2} parent=0 // pred_fallthru
    _
  %v15 = vld [vmem:[%s1] sm:$0xff]
  %v16 = vld [vmem:[%s1 + $0x8] sm:$0xff]
  %v17 = vld [vmem:[%s1 + $0x10] sm:$0xff]
  %v18 = vld [vmem:[%s1 + $0x18] sm:$0xff]
  %v19 = vld [vmem:[%s2] sm:$0xf]
  %v20 = vld [vmem:[%s2 + $0x4] sm:$0xf]
  %v21 = vld [vmem:[%s2 + $0x8] sm:$0xf]
  %v22 = vld [vmem:[%s2 + $0xc] sm:$0xf]
  %v23 = vld [vmem:[%s2 + $0x10] sm:$0xf]
  %v24 = vld [vmem:[%s2 + $0x14] sm:$0xf]
  %v25 = vld [vmem:[%s2 + $0x18] sm:$0xf]
  %v26 = vld [vmem:[%s2 + $0x1c] sm:$0xf]
  %v27 = vld [vmem:[%s0] ss:$8 sm:$0x3]
  %v29 = vlaneseq
  %v30 = vshrl.u32 %v29, 7
  %v31 = vsub.s32 0, %v30
  %v32 = vrot.slane %v27, %v31
  %v33 = vlaneseq
  %v34 = vshrl.u32 %v33, 7
  %v35 = vsub.s32 1, %v34
  %v36 = vrot.slane %v27, %v35
  %v39 = vadd.f32 %v15, %v32
  %v40 = vadd.f32 %v16, %v36
  %v41 = vadd.f32 %v17, %v32
  %v42 = vadd.f32 %v18, %v36
  %v43 = vmax.f32 %v39, 0.0
  %v44 = vmax.f32 %v40, 0.0
  %v45 = vmax.f32 %v41, 0.0
  %v46 = vmax.f32 %v42, 0.0
  %49 = vrot.lane.b32.xlu0 %v43, 64
  %v50 = vpop.permute.xlu0 %49
  %51 = vrot.lane.b32.xlu0 %v45, 64
  %v52 = vpop.permute.xlu0 %51
  %v55 = vmax.f32 %v43, %v50
  %v56 = vmax.f32 %v45, %v52
  %59 = vrot.lane.b32.xlu0 %v44, 64
  %v60 = vpop.permute.xlu0 %59
  %61 = vrot.lane.b32.xlu0 %v46, 64
  %v62 = vpop.permute.xlu0 %61
  %v65 = vmax.f32 %v44, %v60
  %v66 = vmax.f32 %v46, %v62
  %v67 = vmax.f32 %v55, %v65
  %v68 = vmax.f32 %v56, %v66
  %v69 = vpack.c.bf16 %v68, %v67
  %v78 = vunpack.c.l.b16 %v19
  %v79 = vunpack.c.l.b16 %v20
  %v80 = vunpack.c.l.b16 %v21
  %v81 = vunpack.c.l.b16 %v22
  %v82 = vunpack.c.l.b16 %v23
  %v83 = vunpack.c.l.b16 %v24
  %v84 = vunpack.c.l.b16 %v25
  %v85 = vunpack.c.l.b16 %v26
  %v86 = vpack.c.b16 %v79, %v78
  %v87 = vpack.c.b16 %v81, %v80
  %v88 = vpack.c.b16 %v83, %v82
  %v89 = vpack.c.b16 %v85, %v84
  %vm94 = vcmask 523264
  %v96 = vsel %vm94, %v69, 0
  %98 = vmatprep.subr.bf16.mxu0 0
  %99 = vmatpush1.bf16.msra.mxu0 %v86
  %100 = vmatprep.subr.bf16.mxu0 0
  %101 = vmatpush1.bf16.msra.mxu0 %v87
  %102 = vmatprep.subr.bf16.mxu0 0
  %103 = vmatpush1.bf16.msra.mxu0 %v88
  %104 = vmatprep.subr.bf16.mxu0 0
  %105 = vmatpush1.bf16.msra.mxu0 %v89
  %106 = vmatprep.subr.bf16.mxu0 0
  %107 = vmatpush1.bf16.msra.mxu0 0
  %108 = vmatprep.subr.bf16.mxu0 0
  %109 = vmatpush1.bf16.msra.mxu0 0
  %110 = vmatprep.subr.bf16.mxu0 0
  %111 = vmatpush1.bf16.msra.mxu0 0
  %112 = vmatprep.subr.bf16.mxu0 0
  %113 = vmatpush1.bf16.msra.mxu0 0
  %114 = vmatprep.subr.bf16.mxu0 0
  %115 = vmatpush1.bf16.msra.mxu0 0
  %116 = vmatprep.subr.bf16.mxu0 0
  %117 = vmatpush1.bf16.msra.mxu0 0
  %118 = vmatprep.subr.bf16.mxu0 0
  %119 = vmatpush1.bf16.msra.mxu0 0
  %120 = vmatprep.subr.bf16.mxu0 0
  %121 = vmatpush1.bf16.msra.mxu0 0
  %122 = vmatprep.subr.bf16.mxu0 0
  %123 = vmatpush1.bf16.msra.mxu0 0
  %124 = vmatprep.subr.bf16.mxu0 0
  %125 = vmatpush1.bf16.msra.mxu0 0
  %126 = vmatprep.subr.bf16.mxu0 0
  %127 = vmatpush1.bf16.msra.mxu0 0
  %128 = vmatprep.subr.bf16.mxu0 0
  %129 = vmatpush1.bf16.msra.mxu0 0
  %130 = vmatprep.mubr.bf16.mxu0 0
  %131 = vmatmul.mubr.bf16.gmra.mrb[0].mxu0 %v96
  %v132 = vpop.f32.mrb[0].mxu0
  %v133 = vadd.f32 0.0, %v132
  %v134 = vpop.f32.mrb[0].mxu0
  %v135 = vpop.f32.mrb[0].mxu0
  %v136 = vadd.f32 0.0, %v135
  %v137 = vpop.f32.mrb[0].mxu0
  %138 = vdwg.mxu0
  %v139 = vpack.c.bf16 %v136, %v133
  %v141 = vunpack.c.l.b16 %v139
  %v142 = vunpack.c.h.b16 %v139
  %v143 = vpack.c.b16 %v141, %v141
  %v144 = vpack.c.b16 %v142, %v142
  %vm147 = vcmask 519168
  %148 = vst.msk [vmem:[%s3] sm:$0xf] %vm147, %v143
  %149 = vst.msk [vmem:[%s3 + $0x4] sm:$0xf] %vm147, %v144
  %s150 = scalar_lea.vmem %s0, 1
  %v151 = vld [vmem:[%s150] ss:$8 sm:$0x3]
  %v153 = vlaneseq
  %v154 = vshrl.u32 %v153, 7
  %v155 = vsub.s32 0, %v154
  %v156 = vrot.slane %v151, %v155
  %v157 = vlaneseq
  %v158 = vshrl.u32 %v157, 7
  %v159 = vsub.s32 1, %v158
  %v160 = vrot.slane %v151, %v159
  %v163 = vadd.f32 %v15, %v156
  %v164 = vadd.f32 %v16, %v160
  %v165 = vadd.f32 %v17, %v156
  %v166 = vadd.f32 %v18, %v160
  %v167 = vmax.f32 %v163, 0.0
  %v168 = vmax.f32 %v164, 0.0
  %v169 = vmax.f32 %v165, 0.0
  %v170 = vmax.f32 %v166, 0.0
  %173 = vrot.lane.b32.xlu0 %v167, 64
  %v174 = vpop.permute.xlu0 %173
  %175 = vrot.lane.b32.xlu0 %v169, 64
  %v176 = vpop.permute.xlu0 %175
  %v179 = vmax.f32 %v167, %v174
  %v180 = vmax.f32 %v169, %v176
  %183 = vrot.lane.b32.xlu0 %v168, 64
  %v184 = vpop.permute.xlu0 %183
  %185 = vrot.lane.b32.xlu0 %v170, 64
  %v186 = vpop.permute.xlu0 %185
  %v189 = vmax.f32 %v168, %v184
  %v190 = vmax.f32 %v170, %v186
  %v191 = vmax.f32 %v179, %v189
  %v192 = vmax.f32 %v180, %v190
  %v193 = vpack.c.bf16 %v192, %v191
  %v195 = vsel %vm94, %v193, 0
  %197 = vmatprep.subr.bf16.mxu0 0
  %198 = vmatpush1.bf16.msra.mxu0 %v86
  %199 = vmatprep.subr.bf16.mxu0 0
  %200 = vmatpush1.bf16.msra.mxu0 %v87
  %201 = vmatprep.subr.bf16.mxu0 0
  %202 = vmatpush1.bf16.msra.mxu0 %v88
  %203 = vmatprep.subr.bf16.mxu0 0
  %204 = vmatpush1.bf16.msra.mxu0 %v89
  %205 = vmatprep.subr.bf16.mxu0 0
  %206 = vmatpush1.bf16.msra.mxu0 0
  %207 = vmatprep.subr.bf16.mxu0 0
  %208 = vmatpush1.bf16.msra.mxu0 0
  %209 = vmatprep.subr.bf16.mxu0 0
  %210 = vmatpush1.bf16.msra.mxu0 0
  %211 = vmatprep.subr.bf16.mxu0 0
  %212 = vmatpush1.bf16.msra.mxu0 0
  %213 = vmatprep.subr.bf16.mxu0 0
  %214 = vmatpush1.bf16.msra.mxu0 0
  %215 = vmatprep.subr.bf16.mxu0 0
  %216 = vmatpush1.bf16.msra.mxu0 0
  %217 = vmatprep.subr.bf16.mxu0 0
  %218 = vmatpush1.bf16.msra.mxu0 0
  %219 = vmatprep.subr.bf16.mxu0 0
  %220 = vmatpush1.bf16.msra.mxu0 0
  %221 = vmatprep.subr.bf16.mxu0 0
  %222 = vmatpush1.bf16.msra.mxu0 0
  %223 = vmatprep.subr.bf16.mxu0 0
  %224 = vmatpush1.bf16.msra.mxu0 0
  %225 = vmatprep.subr.bf16.mxu0 0
  %226 = vmatpush1.bf16.msra.mxu0 0
  %227 = vmatprep.subr.bf16.mxu0 0
  %228 = vmatpush1.bf16.msra.mxu0 0
  %229 = vmatprep.mubr.bf16.mxu0 0
  %230 = vmatmul.mubr.bf16.gmra.mrb[0].mxu0 %v195
  %v231 = vpop.f32.mrb[0].mxu0
  %v232 = vadd.f32 0.0, %v231
  %v233 = vpop.f32.mrb[0].mxu0
  %v234 = vpop.f32.mrb[0].mxu0
  %v235 = vadd.f32 0.0, %v234
  %v236 = vpop.f32.mrb[0].mxu0
  %237 = vdwg.mxu0
  %v238 = vpack.c.bf16 %v235, %v232
  %v240 = vunpack.c.l.b16 %v238
  %v241 = vunpack.c.h.b16 %v238
  %v242 = vpack.c.b16 %v240, %v240
  %v243 = vpack.c.b16 %v241, %v241
  %s246 = scalar_lea.vmem %s3, 8
  %247 = vst.msk [vmem:[%s246] sm:$0xf] %vm147, %v242
  %248 = vst.msk [vmem:[%s246 + $0x4] sm:$0xf] %vm147, %v243
  %s249 = scalar_lea.vmem %s0, 2
  %v250 = vld [vmem:[%s249] ss:$8 sm:$0x3]
  %v252 = vlaneseq
  %v253 = vshrl.u32 %v252, 7
  %v254 = vsub.s32 0, %v253
  %v255 = vrot.slane %v250, %v254
  %v256 = vlaneseq
  %v257 = vshrl.u32 %v256, 7
  %v258 = vsub.s32 1, %v257
  %v259 = vrot.slane %v250, %v258
  %v262 = vadd.f32 %v15, %v255
  %v263 = vadd.f32 %v16, %v259
  %v264 = vadd.f32 %v17, %v255
  %v265 = vadd.f32 %v18, %v259
  %v266 = vmax.f32 %v262, 0.0
  %v267 = vmax.f32 %v263, 0.0
  %v268 = vmax.f32 %v264, 0.0
  %v269 = vmax.f32 %v265, 0.0
  %272 = vrot.lane.b32.xlu0 %v266, 64
  %v273 = vpop.permute.xlu0 %272
  %274 = vrot.lane.b32.xlu0 %v268, 64
  %v275 = vpop.permute.xlu0 %274
  %v278 = vmax.f32 %v266, %v273
  %v279 = vmax.f32 %v268, %v275
  %282 = vrot.lane.b32.xlu0 %v267, 64
  %v283 = vpop.permute.xlu0 %282
  %284 = vrot.lane.b32.xlu0 %v269, 64
  %v285 = vpop.permute.xlu0 %284
  %v288 = vmax.f32 %v267, %v283
  %v289 = vmax.f32 %v269, %v285
  %v290 = vmax.f32 %v278, %v288
  %v291 = vmax.f32 %v279, %v289
  %v292 = vpack.c.bf16 %v291, %v290
  %v294 = vsel %vm94, %v292, 0
  %296 = vmatprep.subr.bf16.mxu0 0
  %297 = vmatpush1.bf16.msra.mxu0 %v86
  %298 = vmatprep.subr.bf16.mxu0 0
  %299 = vmatpush1.bf16.msra.mxu0 %v87
  %300 = vmatprep.subr.bf16.mxu0 0
  %301 = vmatpush1.bf16.msra.mxu0 %v88
  %302 = vmatprep.subr.bf16.mxu0 0
  %303 = vmatpush1.bf16.msra.mxu0 %v89
  %304 = vmatprep.subr.bf16.mxu0 0
  %305 = vmatpush1.bf16.msra.mxu0 0
  %306 = vmatprep.subr.bf16.mxu0 0
  %307 = vmatpush1.bf16.msra.mxu0 0
  %308 = vmatprep.subr.bf16.mxu0 0
  %309 = vmatpush1.bf16.msra.mxu0 0
  %310 = vmatprep.subr.bf16.mxu0 0
  %311 = vmatpush1.bf16.msra.mxu0 0
  %312 = vmatprep.subr.bf16.mxu0 0
  %313 = vmatpush1.bf16.msra.mxu0 0
  %314 = vmatprep.subr.bf16.mxu0 0
  %315 = vmatpush1.bf16.msra.mxu0 0
  %316 = vmatprep.subr.bf16.mxu0 0
  %317 = vmatpush1.bf16.msra.mxu0 0
  %318 = vmatprep.subr.bf16.mxu0 0
  %319 = vmatpush1.bf16.msra.mxu0 0
  %320 = vmatprep.subr.bf16.mxu0 0
  %321 = vmatpush1.bf16.msra.mxu0 0
  %322 = vmatprep.subr.bf16.mxu0 0
  %323 = vmatpush1.bf16.msra.mxu0 0
  %324 = vmatprep.subr.bf16.mxu0 0
  %325 = vmatpush1.bf16.msra.mxu0 0
  %326 = vmatprep.subr.bf16.mxu0 0
  %327 = vmatpush1.bf16.msra.mxu0 0
  %328 = vmatprep.mubr.bf16.mxu0 0
  %329 = vmatmul.mubr.bf16.gmra.mrb[0].mxu0 %v294
  %v330 = vpop.f32.mrb[0].mxu0
  %v331 = vadd.f32 0.0, %v330
  %v332 = vpop.f32.mrb[0].mxu0
  %v333 = vpop.f32.mrb[0].mxu0
  %v334 = vadd.f32 0.0, %v333
  %v335 = vpop.f32.mrb[0].mxu0
  %336 = vdwg.mxu0
  %v337 = vpack.c.bf16 %v334, %v331
  %v339 = vunpack.c.l.b16 %v337
  %v340 = vunpack.c.h.b16 %v337
  %v341 = vpack.c.b16 %v339, %v339
  %v342 = vpack.c.b16 %v340, %v340
  %s345 = scalar_lea.vmem %s3, 16
  %346 = vst.msk [vmem:[%s345] sm:$0xf] %vm147, %v341
  %347 = vst.msk [vmem:[%s345 + $0x4] sm:$0xf] %vm147, %v342
  %s348 = scalar_lea.vmem %s0, 3
  %v349 = vld [vmem:[%s348] ss:$8 sm:$0x3]
  %v351 = vlaneseq
  %v352 = vshrl.u32 %v351, 7
  %v353 = vsub.s32 0, %v352
  %v354 = vrot.slane %v349, %v353
  %v355 = vlaneseq
  %v356 = vshrl.u32 %v355, 7
  %v357 = vsub.s32 1, %v356
  %v358 = vrot.slane %v349, %v357
  %v361 = vadd.f32 %v15, %v354
  %v362 = vadd.f32 %v16, %v358
  %v363 = vadd.f32 %v17, %v354
  %v364 = vadd.f32 %v18, %v358
  %v365 = vmax.f32 %v361, 0.0
  %v366 = vmax.f32 %v362, 0.0
  %v367 = vmax.f32 %v363, 0.0
  %v368 = vmax.f32 %v364, 0.0
  %371 = vrot.lane.b32.xlu0 %v365, 64
  %v372 = vpop.permute.xlu0 %371
  %373 = vrot.lane.b32.xlu0 %v367, 64
  %v374 = vpop.permute.xlu0 %373
  %v377 = vmax.f32 %v365, %v372
  %v378 = vmax.f32 %v367, %v374
  %381 = vrot.lane.b32.xlu0 %v366, 64
  %v382 = vpop.permute.xlu0 %381
  %383 = vrot.lane.b32.xlu0 %v368, 64
  %v384 = vpop.permute.xlu0 %383
  %v387 = vmax.f32 %v366, %v382
  %v388 = vmax.f32 %v368, %v384
  %v389 = vmax.f32 %v377, %v387
  %v390 = vmax.f32 %v378, %v388
  %v391 = vpack.c.bf16 %v390, %v389
  %v393 = vsel %vm94, %v391, 0
  %395 = vmatprep.subr.bf16.mxu0 0
  %396 = vmatpush1.bf16.msra.mxu0 %v86
  %397 = vmatprep.subr.bf16.mxu0 0
  %398 = vmatpush1.bf16.msra.mxu0 %v87
  %399 = vmatprep.subr.bf16.mxu0 0
  %400 = vmatpush1.bf16.msra.mxu0 %v88
  %401 = vmatprep.subr.bf16.mxu0 0
  %402 = vmatpush1.bf16.msra.mxu0 %v89
  %403 = vmatprep.subr.bf16.mxu0 0
  %404 = vmatpush1.bf16.msra.mxu0 0
  %405 = vmatprep.subr.bf16.mxu0 0
  %406 = vmatpush1.bf16.msra.mxu0 0
  %407 = vmatprep.subr.bf16.mxu0 0
  %408 = vmatpush1.bf16.msra.mxu0 0
  %409 = vmatprep.subr.bf16.mxu0 0
  %410 = vmatpush1.bf16.msra.mxu0 0
  %411 = vmatprep.subr.bf16.mxu0 0
  %412 = vmatpush1.bf16.msra.mxu0 0
  %413 = vmatprep.subr.bf16.mxu0 0
  %414 = vmatpush1.bf16.msra.mxu0 0
  %415 = vmatprep.subr.bf16.mxu0 0
  %416 = vmatpush1.bf16.msra.mxu0 0
  %417 = vmatprep.subr.bf16.mxu0 0
  %418 = vmatpush1.bf16.msra.mxu0 0
  %419 = vmatprep.subr.bf16.mxu0 0
  %420 = vmatpush1.bf16.msra.mxu0 0
  %421 = vmatprep.subr.bf16.mxu0 0
  %422 = vmatpush1.bf16.msra.mxu0 0
  %423 = vmatprep.subr.bf16.mxu0 0
  %424 = vmatpush1.bf16.msra.mxu0 0
  %425 = vmatprep.subr.bf16.mxu0 0
  %426 = vmatpush1.bf16.msra.mxu0 0
  %427 = vmatprep.mubr.bf16.mxu0 0
  %428 = vmatmul.mubr.bf16.gmra.mrb[0].mxu0 %v393
  %v429 = vpop.f32.mrb[0].mxu0
  %v430 = vadd.f32 0.0, %v429
  %v431 = vpop.f32.mrb[0].mxu0
  %v432 = vpop.f32.mrb[0].mxu0
  %v433 = vadd.f32 0.0, %v432
  %v434 = vpop.f32.mrb[0].mxu0
  %435 = vdwg.mxu0
  %v436 = vpack.c.bf16 %v433, %v430
  %v438 = vunpack.c.l.b16 %v436
  %v439 = vunpack.c.h.b16 %v436
  %v440 = vpack.c.b16 %v438, %v438
  %v441 = vpack.c.b16 %v439, %v439
  %s444 = scalar_lea.vmem %s3, 24
  %445 = vst.msk [vmem:[%s444] sm:$0xf] %vm147, %v440
  %446 = vst.msk [vmem:[%s444 + $0x4] sm:$0xf] %vm147, %v441
  %s447 = scalar_lea.vmem %s0, 4
  %v448 = vld [vmem:[%s447] ss:$8 sm:$0x3]
  %v450 = vlaneseq
  %v451 = vshrl.u32 %v450, 7
  %v452 = vsub.s32 0, %v451
  %v453 = vrot.slane %v448, %v452
  %v454 = vlaneseq
  %v455 = vshrl.u32 %v454, 7
  %v456 = vsub.s32 1, %v455
  %v457 = vrot.slane %v448, %v456
  %v460 = vadd.f32 %v15, %v453
  %v461 = vadd.f32 %v16, %v457
  %v462 = vadd.f32 %v17, %v453
  %v463 = vadd.f32 %v18, %v457
  %v464 = vmax.f32 %v460, 0.0
  %v465 = vmax.f32 %v461, 0.0
  %v466 = vmax.f32 %v462, 0.0
  %v467 = vmax.f32 %v463, 0.0
  %470 = vrot.lane.b32.xlu0 %v464, 64
  %v471 = vpop.permute.xlu0 %470
  %472 = vrot.lane.b32.xlu0 %v466, 64
  %v473 = vpop.permute.xlu0 %472
  %v476 = vmax.f32 %v464, %v471
  %v477 = vmax.f32 %v466, %v473
  %480 = vrot.lane.b32.xlu0 %v465, 64
  %v481 = vpop.permute.xlu0 %480
  %482 = vrot.lane.b32.xlu0 %v467, 64
  %v483 = vpop.permute.xlu0 %482
  %v486 = vmax.f32 %v465, %v481
  %v487 = vmax.f32 %v467, %v483
  %v488 = vmax.f32 %v476, %v486
  %v489 = vmax.f32 %v477, %v487
  %v490 = vpack.c.bf16 %v489, %v488
  %v492 = vsel %vm94, %v490, 0
  %494 = vmatprep.subr.bf16.mxu0 0
  %495 = vmatpush1.bf16.msra.mxu0 %v86
  %496 = vmatprep.subr.bf16.mxu0 0
  %497 = vmatpush1.bf16.msra.mxu0 %v87
  %498 = vmatprep.subr.bf16.mxu0 0
  %499 = vmatpush1.bf16.msra.mxu0 %v88
  %500 = vmatprep.subr.bf16.mxu0 0
  %501 = vmatpush1.bf16.msra.mxu0 %v89
  %502 = vmatprep.subr.bf16.mxu0 0
  %503 = vmatpush1.bf16.msra.mxu0 0
  %504 = vmatprep.subr.bf16.mxu0 0
  %505 = vmatpush1.bf16.msra.mxu0 0
  %506 = vmatprep.subr.bf16.mxu0 0
  %507 = vmatpush1.bf16.msra.mxu0 0
  %508 = vmatprep.subr.bf16.mxu0 0
  %509 = vmatpush1.bf16.msra.mxu0 0
  %510 = vmatprep.subr.bf16.mxu0 0
  %511 = vmatpush1.bf16.msra.mxu0 0
  %512 = vmatprep.subr.bf16.mxu0 0
  %513 = vmatpush1.bf16.msra.mxu0 0
  %514 = vmatprep.subr.bf16.mxu0 0
  %515 = vmatpush1.bf16.msra.mxu0 0
  %516 = vmatprep.subr.bf16.mxu0 0
  %517 = vmatpush1.bf16.msra.mxu0 0
  %518 = vmatprep.subr.bf16.mxu0 0
  %519 = vmatpush1.bf16.msra.mxu0 0
  %520 = vmatprep.subr.bf16.mxu0 0
  %521 = vmatpush1.bf16.msra.mxu0 0
  %522 = vmatprep.subr.bf16.mxu0 0
  %523 = vmatpush1.bf16.msra.mxu0 0
  %524 = vmatprep.subr.bf16.mxu0 0
  %525 = vmatpush1.bf16.msra.mxu0 0
  %526 = vmatprep.mubr.bf16.mxu0 0
  %527 = vmatmul.mubr.bf16.gmra.mrb[0].mxu0 %v492
  %v528 = vpop.f32.mrb[0].mxu0
  %v529 = vadd.f32 0.0, %v528
  %v530 = vpop.f32.mrb[0].mxu0
  %v531 = vpop.f32.mrb[0].mxu0
  %v532 = vadd.f32 0.0, %v531
  %v533 = vpop.f32.mrb[0].mxu0
  %534 = vdwg.mxu0
  %v535 = vpack.c.bf16 %v532, %v529
  %v537 = vunpack.c.l.b16 %v535
  %v538 = vunpack.c.h.b16 %v535
  %v539 = vpack.c.b16 %v537, %v537
  %v540 = vpack.c.b16 %v538, %v538
  %s543 = scalar_lea.vmem %s3, 32
  %544 = vst.msk [vmem:[%s543] sm:$0xf] %vm147, %v539
  %545 = vst.msk [vmem:[%s543 + $0x4] sm:$0xf] %vm147, %v540
  %s546 = scalar_lea.vmem %s0, 5
  %v547 = vld [vmem:[%s546] ss:$8 sm:$0x3]
  %v549 = vlaneseq
  %v550 = vshrl.u32 %v549, 7
  %v551 = vsub.s32 0, %v550
  %v552 = vrot.slane %v547, %v551
  %v553 = vlaneseq
  %v554 = vshrl.u32 %v553, 7
  %v555 = vsub.s32 1, %v554
  %v556 = vrot.slane %v547, %v555
  %v559 = vadd.f32 %v15, %v552
  %v560 = vadd.f32 %v16, %v556
  %v561 = vadd.f32 %v17, %v552
  %v562 = vadd.f32 %v18, %v556
  %v563 = vmax.f32 %v559, 0.0
  %v564 = vmax.f32 %v560, 0.0
  %v565 = vmax.f32 %v561, 0.0
  %v566 = vmax.f32 %v562, 0.0
  %569 = vrot.lane.b32.xlu0 %v563, 64
  %v570 = vpop.permute.xlu0 %569
  %571 = vrot.lane.b32.xlu0 %v565, 64
  %v572 = vpop.permute.xlu0 %571
  %v575 = vmax.f32 %v563, %v570
  %v576 = vmax.f32 %v565, %v572
  %579 = vrot.lane.b32.xlu0 %v564, 64
  %v580 = vpop.permute.xlu0 %579
  %581 = vrot.lane.b32.xlu0 %v566, 64
  %v582 = vpop.permute.xlu0 %581
  %v585 = vmax.f32 %v564, %v580
  %v586 = vmax.f32 %v566, %v582
  %v587 = vmax.f32 %v575, %v585
  %v588 = vmax.f32 %v576, %v586
  %v589 = vpack.c.bf16 %v588, %v587
  %v591 = vsel %vm94, %v589, 0
  %593 = vmatprep.subr.bf16.mxu0 0
  %594 = vmatpush1.bf16.msra.mxu0 %v86
  %595 = vmatprep.subr.bf16.mxu0 0
  %596 = vmatpush1.bf16.msra.mxu0 %v87
  %597 = vmatprep.subr.bf16.mxu0 0
  %598 = vmatpush1.bf16.msra.mxu0 %v88
  %599 = vmatprep.subr.bf16.mxu0 0
  %600 = vmatpush1.bf16.msra.mxu0 %v89
  %601 = vmatprep.subr.bf16.mxu0 0
  %602 = vmatpush1.bf16.msra.mxu0 0
  %603 = vmatprep.subr.bf16.mxu0 0
  %604 = vmatpush1.bf16.msra.mxu0 0
  %605 = vmatprep.subr.bf16.mxu0 0
  %606 = vmatpush1.bf16.msra.mxu0 0
  %607 = vmatprep.subr.bf16.mxu0 0
  %608 = vmatpush1.bf16.msra.mxu0 0
  %609 = vmatprep.subr.bf16.mxu0 0
  %610 = vmatpush1.bf16.msra.mxu0 0
  %611 = vmatprep.subr.bf16.mxu0 0
  %612 = vmatpush1.bf16.msra.mxu0 0
  %613 = vmatprep.subr.bf16.mxu0 0
  %614 = vmatpush1.bf16.msra.mxu0 0
  %615 = vmatprep.subr.bf16.mxu0 0
  %616 = vmatpush1.bf16.msra.mxu0 0
  %617 = vmatprep.subr.bf16.mxu0 0
  %618 = vmatpush1.bf16.msra.mxu0 0
  %619 = vmatprep.subr.bf16.mxu0 0
  %620 = vmatpush1.bf16.msra.mxu0 0
  %621 = vmatprep.subr.bf16.mxu0 0
  %622 = vmatpush1.bf16.msra.mxu0 0
  %623 = vmatprep.subr.bf16.mxu0 0
  %624 = vmatpush1.bf16.msra.mxu0 0
  %625 = vmatprep.mubr.bf16.mxu0 0
  %626 = vmatmul.mubr.bf16.gmra.mrb[0].mxu0 %v591
  %v627 = vpop.f32.mrb[0].mxu0
  %v628 = vadd.f32 0.0, %v627
  %v629 = vpop.f32.mrb[0].mxu0
  %v630 = vpop.f32.mrb[0].mxu0
  %v631 = vadd.f32 0.0, %v630
  %v632 = vpop.f32.mrb[0].mxu0
  %633 = vdwg.mxu0
  %v634 = vpack.c.bf16 %v631, %v628
  %v636 = vunpack.c.l.b16 %v634
  %v637 = vunpack.c.h.b16 %v634
  %v638 = vpack.c.b16 %v636, %v636
  %v639 = vpack.c.b16 %v637, %v637
  %s642 = scalar_lea.vmem %s3, 40
  %643 = vst.msk [vmem:[%s642] sm:$0xf] %vm147, %v638
  %644 = vst.msk [vmem:[%s642 + $0x4] sm:$0xf] %vm147, %v639
  %s645 = scalar_lea.vmem %s0, 6
  %v646 = vld [vmem:[%s645] ss:$8 sm:$0x3]
  %v648 = vlaneseq
  %v649 = vshrl.u32 %v648, 7
  %v650 = vsub.s32 0, %v649
  %v651 = vrot.slane %v646, %v650
  %v652 = vlaneseq
  %v653 = vshrl.u32 %v652, 7
  %v654 = vsub.s32 1, %v653
  %v655 = vrot.slane %v646, %v654
  %v658 = vadd.f32 %v15, %v651
  %v659 = vadd.f32 %v16, %v655
  %v660 = vadd.f32 %v17, %v651
  %v661 = vadd.f32 %v18, %v655
  %v662 = vmax.f32 %v658, 0.0
  %v663 = vmax.f32 %v659, 0.0
  %v664 = vmax.f32 %v660, 0.0
  %v665 = vmax.f32 %v661, 0.0
  %668 = vrot.lane.b32.xlu0 %v662, 64
  %v669 = vpop.permute.xlu0 %668
  %670 = vrot.lane.b32.xlu0 %v664, 64
  %v671 = vpop.permute.xlu0 %670
  %v674 = vmax.f32 %v662, %v669
  %v675 = vmax.f32 %v664, %v671
  %678 = vrot.lane.b32.xlu0 %v663, 64
  %v679 = vpop.permute.xlu0 %678
  %680 = vrot.lane.b32.xlu0 %v665, 64
  %v681 = vpop.permute.xlu0 %680
  %v684 = vmax.f32 %v663, %v679
  %v685 = vmax.f32 %v665, %v681
  %v686 = vmax.f32 %v674, %v684
  %v687 = vmax.f32 %v675, %v685
  %v688 = vpack.c.bf16 %v687, %v686
  %v690 = vsel %vm94, %v688, 0
  %692 = vmatprep.subr.bf16.mxu0 0
  %693 = vmatpush1.bf16.msra.mxu0 %v86
  %694 = vmatprep.subr.bf16.mxu0 0
  %695 = vmatpush1.bf16.msra.mxu0 %v87
  %696 = vmatprep.subr.bf16.mxu0 0
  %697 = vmatpush1.bf16.msra.mxu0 %v88
  %698 = vmatprep.subr.bf16.mxu0 0
  %699 = vmatpush1.bf16.msra.mxu0 %v89
  %700 = vmatprep.subr.bf16.mxu0 0
  %701 = vmatpush1.bf16.msra.mxu0 0
  %702 = vmatprep.subr.bf16.mxu0 0
  %703 = vmatpush1.bf16.msra.mxu0 0
  %704 = vmatprep.subr.bf16.mxu0 0
  %705 = vmatpush1.bf16.msra.mxu0 0
  %706 = vmatprep.subr.bf16.mxu0 0
  %707 = vmatpush1.bf16.msra.mxu0 0
  %708 = vmatprep.subr.bf16.mxu0 0
  %709 = vmatpush1.bf16.msra.mxu0 0
  %710 = vmatprep.subr.bf16.mxu0 0
  %711 = vmatpush1.bf16.msra.mxu0 0
  %712 = vmatprep.subr.bf16.mxu0 0
  %713 = vmatpush1.bf16.msra.mxu0 0
  %714 = vmatprep.subr.bf16.mxu0 0
  %715 = vmatpush1.bf16.msra.mxu0 0
  %716 = vmatprep.subr.bf16.mxu0 0
  %717 = vmatpush1.bf16.msra.mxu0 0
  %718 = vmatprep.subr.bf16.mxu0 0
  %719 = vmatpush1.bf16.msra.mxu0 0
  %720 = vmatprep.subr.bf16.mxu0 0
  %721 = vmatpush1.bf16.msra.mxu0 0
  %722 = vmatprep.subr.bf16.mxu0 0
  %723 = vmatpush1.bf16.msra.mxu0 0
  %724 = vmatprep.mubr.bf16.mxu0 0
  %725 = vmatmul.mubr.bf16.gmra.mrb[0].mxu0 %v690
  %v726 = vpop.f32.mrb[0].mxu0
  %v727 = vadd.f32 0.0, %v726
  %v728 = vpop.f32.mrb[0].mxu0
  %v729 = vpop.f32.mrb[0].mxu0
  %v730 = vadd.f32 0.0, %v729
  %v731 = vpop.f32.mrb[0].mxu0
  %732 = vdwg.mxu0
  %v733 = vpack.c.bf16 %v730, %v727
  %v735 = vunpack.c.l.b16 %v733
  %v736 = vunpack.c.h.b16 %v733
  %v737 = vpack.c.b16 %v735, %v735
  %v738 = vpack.c.b16 %v736, %v736
  %s741 = scalar_lea.vmem %s3, 48
  %742 = vst.msk [vmem:[%s741] sm:$0xf] %vm147, %v737
  %743 = vst.msk [vmem:[%s741 + $0x4] sm:$0xf] %vm147, %v738
  %s744 = scalar_lea.vmem %s0, 7
  %v745 = vld [vmem:[%s744] ss:$8 sm:$0x3]
  %v747 = vlaneseq
  %v748 = vshrl.u32 %v747, 7
  %v749 = vsub.s32 0, %v748
  %v750 = vrot.slane %v745, %v749
  %v751 = vlaneseq
  %v752 = vshrl.u32 %v751, 7
  %v753 = vsub.s32 1, %v752
  %v754 = vrot.slane %v745, %v753
  %v757 = vadd.f32 %v15, %v750
  %v758 = vadd.f32 %v16, %v754
  %v759 = vadd.f32 %v17, %v750
  %v760 = vadd.f32 %v18, %v754
  %v761 = vmax.f32 %v757, 0.0
  %v762 = vmax.f32 %v758, 0.0
  %v763 = vmax.f32 %v759, 0.0
  %v764 = vmax.f32 %v760, 0.0
  %767 = vrot.lane.b32.xlu0 %v761, 64
  %v768 = vpop.permute.xlu0 %767
  %769 = vrot.lane.b32.xlu0 %v763, 64
  %v770 = vpop.permute.xlu0 %769
  %v773 = vmax.f32 %v761, %v768
  %v774 = vmax.f32 %v763, %v770
  %777 = vrot.lane.b32.xlu0 %v762, 64
  %v778 = vpop.permute.xlu0 %777
  %779 = vrot.lane.b32.xlu0 %v764, 64
  %v780 = vpop.permute.xlu0 %779
  %v783 = vmax.f32 %v762, %v778
  %v784 = vmax.f32 %v764, %v780
  %v785 = vmax.f32 %v773, %v783
  %v786 = vmax.f32 %v774, %v784
  %v787 = vpack.c.bf16 %v786, %v785
  %v789 = vsel %vm94, %v787, 0
  %791 = vmatprep.subr.bf16.mxu0 0
  %792 = vmatpush1.bf16.msra.mxu0 %v86
  %793 = vmatprep.subr.bf16.mxu0 0
  %794 = vmatpush1.bf16.msra.mxu0 %v87
  %795 = vmatprep.subr.bf16.mxu0 0
  %796 = vmatpush1.bf16.msra.mxu0 %v88
  %797 = vmatprep.subr.bf16.mxu0 0
  %798 = vmatpush1.bf16.msra.mxu0 %v89
  %799 = vmatprep.subr.bf16.mxu0 0
  %800 = vmatpush1.bf16.msra.mxu0 0
  %801 = vmatprep.subr.bf16.mxu0 0
  %802 = vmatpush1.bf16.msra.mxu0 0
  %803 = vmatprep.subr.bf16.mxu0 0
  %804 = vmatpush1.bf16.msra.mxu0 0
  %805 = vmatprep.subr.bf16.mxu0 0
  %806 = vmatpush1.bf16.msra.mxu0 0
  %807 = vmatprep.subr.bf16.mxu0 0
  %808 = vmatpush1.bf16.msra.mxu0 0
  %809 = vmatprep.subr.bf16.mxu0 0
  %810 = vmatpush1.bf16.msra.mxu0 0
  %811 = vmatprep.subr.bf16.mxu0 0
  %812 = vmatpush1.bf16.msra.mxu0 0
  %813 = vmatprep.subr.bf16.mxu0 0
  %814 = vmatpush1.bf16.msra.mxu0 0
  %815 = vmatprep.subr.bf16.mxu0 0
  %816 = vmatpush1.bf16.msra.mxu0 0
  %817 = vmatprep.subr.bf16.mxu0 0
  %818 = vmatpush1.bf16.msra.mxu0 0
  %819 = vmatprep.subr.bf16.mxu0 0
  %820 = vmatpush1.bf16.msra.mxu0 0
  %821 = vmatprep.subr.bf16.mxu0 0
  %822 = vmatpush1.bf16.msra.mxu0 0
  %823 = vmatprep.mubr.bf16.mxu0 0
  %824 = vmatmul.mubr.bf16.gmra.mrb[0].mxu0 %v789
  %v825 = vpop.f32.mrb[0].mxu0
  %v826 = vadd.f32 0.0, %v825
  %v827 = vpop.f32.mrb[0].mxu0
  %v828 = vpop.f32.mrb[0].mxu0
  %v829 = vadd.f32 0.0, %v828
  %v830 = vpop.f32.mrb[0].mxu0
  %831 = vdwg.mxu0
  %v832 = vpack.c.bf16 %v829, %v826
  %v834 = vunpack.c.l.b16 %v832
  %v835 = vunpack.c.h.b16 %v832
  %v836 = vpack.c.b16 %v834, %v834
  %v837 = vpack.c.b16 %v835, %v835
  %s840 = scalar_lea.vmem %s3, 56
  %841 = vst.msk [vmem:[%s840] sm:$0xf] %vm147, %v836
  %842 = vst.msk [vmem:[%s840 + $0x4] sm:$0xf] %vm147, %v837
  // Predicated region
  $region14: #{relation_forward.2} parent=0 // pred_check
    _
  $region15: #{relation_forward.2} parent=0 // pred_check_branch
    %844 = sbr.rel (0) target = $region17
  $region16: #{relation_forward.2} parent=0 // pred_region
    _
  $region17: #{relation_forward.2} parent=0 // pred_fallthru
    _
  // Predicated region
  $region18: #{relation_forward.2} parent=0 // pred_check
    _
  $region19: #{relation_forward.2} parent=0 // pred_check_branch
    %846 = sbr.rel (0) target = $region21
  $region20: #{relation_forward.2} parent=0 // pred_region
    _
  $region21: #{relation_forward.2} parent=0 // pred_fallthru
    _

</llo_original>
